<compile_context>
chip_gen: v7x
topology: tpu7x:2x2x1
jax: 0.10.0
libtpu: 0.0.40
codegen_flags: <defaults>
</compile_context>

<pallas_src>
import functools
import math

import jax
import jax.numpy as jnp
from jax.experimental import pallas as pl
from jax.experimental.pallas import tpu as pltpu

# ------------------------- config (small, consistent with module) -------------
B = 2          # batch
L = 8          # sequence length
D = 32         # hidden_size
H = 4          # num_heads
DH = D // H    # head_dim = 8
M = 64         # mlp_dim
BL = B * L

LN_EPS = 1e-6
RMS_EPS = float(jnp.finfo(jnp.float32).eps)   # torch.nn.RMSNorm(eps=None) default


def _gelu_tanh(x):
    # GELU(approximate='tanh')
    c = math.sqrt(2.0 / math.pi)
    return 0.5 * x * (1.0 + jnp.tanh(c * (x + 0.044715 * x * x * x)))


# ------------------------------- Pallas kernel --------------------------------
def single_stream_kernel(
    x_ref, vecr_ref,              # (BL, D), (BL, D)   [vec rows pre-broadcast]
    wmod_ref, bmod_ref,           # Modulation linear  (D, 3D), (1, 3D)
    wf_ref, bf_ref,               # fused [linear1 | q_swap | k_swap | mlp.0]  (D, 5D+M), (1, 5D+M)
    wm2_ref, bm2_ref,             # mlp[2]             (M, D),  (1, D)
    w2ablk_ref,                   # linear2 attn-half, block-diag per head (D, H*D)
    w2b_ref, b2_ref,              # linear2 mlp-half   (D, D),  (1, D)
    seg_ref,                      # per-head segment-mean matrix (D, D)
    aq_ref, bq_ref, ak_ref, bk_ref,   # fused RMS-weight * RoPE coeff maps (BL, D)
    bias_ref,                     # additive cross-batch mask (BL, BL)
    out_ref,                      # output (BL, D)
    *, num_heads, head_dim, hidden, mlp_dim,
):
    f32 = jnp.float32
    x = x_ref[...]                                   # (BL, D)
    vecr = vecr_ref[...]                             # (BL, D)

    # ---- Modulation(vec): SiLU -> Linear(D,3D) -> (shift, scale, gate), rows already per-(b,l) ----
    sv = vecr * jax.nn.sigmoid(vecr)
    mod = jnp.dot(sv, wmod_ref[...], preferred_element_type=f32) + bmod_ref[...]
    shift = mod[:, 0:hidden]
    scale = mod[:, hidden:2 * hidden]
    gate = mod[:, 2 * hidden:3 * hidden]

    # ---- pre_norm: LayerNorm(no affine, eps=1e-6), then modulate ----
    mu = jnp.mean(x, axis=-1, keepdims=True)
    var = jnp.mean(jnp.square(x - mu), axis=-1, keepdims=True)
    xn = (x - mu) * jax.lax.rsqrt(var + LN_EPS)
    x_mod = (1.0 + scale) * xn + shift               # (BL, D)

    # ---- one fused matmul: qkv | pair-swapped q,k | mlp hidden ----
    fused = jnp.dot(x_mod, wf_ref[...], preferred_element_type=f32) + bf_ref[...]
    d = hidden
    q_all = fused[:, 0:d]
    k_all = fused[:, d:2 * d]
    v_all = fused[:, 2 * d:3 * d]
    q_sw = fused[:, 3 * d:4 * d]                     # pair-swapped raw q
    k_sw = fused[:, 4 * d:5 * d]                     # pair-swapped raw k
    h1 = fused[:, 5 * d:5 * d + mlp_dim]             # mlp[0] pre-activation

    # ---- QKNorm (per-head RMS) fused with RoPE ----
    # per-head mean of squares via one block segment-mean matmul (same value on all
    # lanes of a head), then  q_rot = r * (q * (wq*rope_a) + swap(q) * (swap(wq)*rope_b))
    r_q = jax.lax.rsqrt(jnp.dot(q_all * q_all, seg_ref[...],
                                preferred_element_type=f32) + RMS_EPS)
    r_k = jax.lax.rsqrt(jnp.dot(k_all * k_all, seg_ref[...],
                                preferred_element_type=f32) + RMS_EPS)
    q_rot = r_q * (q_all * aq_ref[...] + q_sw * bq_ref[...])
    k_rot = r_k * (k_all * ak_ref[...] + k_sw * bk_ref[...])

    # ---- MLP branch: GELU(tanh) -> Linear -> GELU(tanh) ----
    h1 = _gelu_tanh(h1)
    mlp_out = jnp.dot(h1, wm2_ref[...], preferred_element_type=f32) + bm2_ref[...]
    mlp_act = _gelu_tanh(mlp_out)                    # (BL, D)

    # ---- linear2([attn | mlp_act]) with the concat folded away ----
    acc = jnp.dot(mlp_act, w2b_ref[...], preferred_element_type=f32) + b2_ref[...]

    # all heads' (v_h @ w2a[head rows]) in one matmul via block-diagonal weight
    vw = jnp.dot(v_all, w2ablk_ref[...], preferred_element_type=f32)   # (BL, H*D)

    sm_scale = 1.0 / math.sqrt(head_dim)
    bias = bias_ref[...]                             # 0 / -1e9 cross-batch mask
    for h in range(num_heads):                       # tiny loop: 2 matmuls + softmax per head
        c0 = h * head_dim
        q_h = q_rot[:, c0:c0 + head_dim]             # (BL, DH)
        k_h = k_rot[:, c0:c0 + head_dim]
        s = jax.lax.dot_general(q_h, k_h, (((1,), (1,)), ((), ())),
                                preferred_element_type=f32) * sm_scale + bias
        s = s - jnp.max(s, axis=-1, keepdims=True)
        p = jnp.exp(s)
        p = p * pl.reciprocal(jnp.sum(p, axis=-1, keepdims=True), approx=True)
        # (p @ v_h) @ w2a_h  ==  p @ (v_h @ w2a_h)  ==  p @ vw[:, h*D:(h+1)*D]
        acc = acc + jnp.dot(p, vw[:, h * hidden:(h + 1) * hidden],
                            preferred_element_type=f32)

    out_ref[...] = x + gate * acc
    # TODO(synk): attention/MLP dropout (training-mode only) is omitted; eval path uses p=0.0.


# ------------------------------ wrapper ---------------------------------------
def single_stream_block(x, vec, pe, params):
    """x: (B, L, D) f32, vec: (B, D) f32, pe: (1, 1, L, DH//2, 2, 2) f32."""
    # --- RoPE tensor -> per-element coefficient maps (plain-JAX glue) ---
    pe2 = pe[0, 0]                                               # (L, DH//2, 2, 2)
    rope_a = jnp.stack([pe2[..., 0, 0], pe2[..., 1, 1]], axis=-1).reshape(L, DH)
    rope_b = jnp.stack([pe2[..., 0, 1], pe2[..., 1, 0]], axis=-1).reshape(L, DH)

    swap_dh = jnp.arange(DH) ^ 1          # pair-swap inside a head
    swap_d = jnp.arange(D) ^ 1            # pair-swap over all heads (heads even-aligned)

    wq, wk = params["wq"], params["wk"]   # (1, DH) RMSNorm weights
    tile_rows = lambda m: jnp.tile(m, (B, 1))                    # (L, D) -> (BL, D)
    aq = tile_rows(jnp.tile(rope_a, (1, H)) * jnp.tile(wq, (1, H)))
    bq = tile_rows(jnp.tile(rope_b, (1, H)) * jnp.tile(wq[:, swap_dh], (1, H)))
    ak = tile_rows(jnp.tile(rope_a, (1, H)) * jnp.tile(wk, (1, H)))
    bk = tile_rows(jnp.tile(rope_b, (1, H)) * jnp.tile(wk[:, swap_dh], (1, H)))

    # --- fused weight: [linear1 (q|k|v) | swapped q cols | swapped k cols | mlp.0] ---
    w1, b1 = params["w1"], params["b1"]
    wm1, bm1 = params["wm1"], params["bm1"]
    w_fused = jnp.concatenate(
        [w1, w1[:, :D][:, swap_d], w1[:, D:2 * D][:, swap_d], wm1], axis=1)
    b_fused = jnp.concatenate(
        [b1, b1[:, :D][:, swap_d], b1[:, D:2 * D][:, swap_d], bm1], axis=1)

    # --- per-head segment-mean matrix (for RMSNorm mean of squares) ---
    lane = jnp.arange(D)
    seg_mean = (lane[:, None] // DH == lane[None, :] // DH).astype(jnp.float32) / DH

    # --- linear2 split: attn half expanded block-diagonally per head, mlp half plain ---
    w2, b2 = params["w2"], params["b2"]
    w2a, w2b = w2[:D, :], w2[D:, :]
    col_head = jnp.arange(H * D) // D
    row_head = lane // DH
    w2a_blk = jnp.where(row_head[:, None] == col_head[None, :],
                        jnp.tile(w2a, (1, H)), 0.0).astype(jnp.float32)

    # --- additive cross-batch mask for the flattened (B*L, B*L) scores ---
    rb = jnp.arange(BL) // L
    attn_bias = jnp.where(rb[:, None] == rb[None, :], 0.0, -1e9).astype(jnp.float32)

    x_flat = x.reshape(BL, D)
    vec_rows = jnp.repeat(vec, L, axis=0)                        # (BL, D)

    kernel = functools.partial(
        single_stream_kernel, num_heads=H, head_dim=DH, hidden=D, mlp_dim=M)

    # Single invocation, no grid: every operand is placed whole in VMEM by default.
    out_flat = pl.pallas_call(
        kernel,
        out_shape=jax.ShapeDtypeStruct((BL, D), jnp.float32),
    )(
        x_flat, vec_rows,
        params["w_mod"], params["b_mod"],
        w_fused, b_fused,
        params["wm2"], params["bm2"],
        w2a_blk, w2b, b2,
        seg_mean,
        aq, bq, ak, bk,
        attn_bias,
    )
    return out_flat.reshape(B, L, D)


# --------------------------- pure-JAX reference --------------------------------
def reference_forward(x, vec, pe, params):
    sv = vec * jax.nn.sigmoid(vec)
    mod = sv @ params["w_mod"] + params["b_mod"][0]            # (B, 3D)
    shift, scale, gate = jnp.split(mod, 3, axis=-1)
    shift, scale, gate = shift[:, None], scale[:, None], gate[:, None]

    mu = x.mean(-1, keepdims=True)
    var = ((x - mu) ** 2).mean(-1, keepdims=True)
    xn = (x - mu) / jnp.sqrt(var + LN_EPS)
    x_mod = (1.0 + scale) * xn + shift

    qkv = x_mod @ params["w1"] + params["b1"][0]               # (B, L, 3D)
    qkv = qkv.reshape(B, L, 3, H, DH).transpose(2, 0, 3, 1, 4)  # K B H L DH
    q, k, v = qkv[0], qkv[1], qkv[2]

    def rms(t, w):
        return t * jax.lax.rsqrt(jnp.mean(t * t, -1, keepdims=True) + RMS_EPS) * w[0]

    q, k = rms(q, params["wq"]), rms(k, params["wk"])

    def rope(t):
        t_ = t.reshape(*t.shape[:-1], DH // 2, 1, 2)
        out = pe[..., 0] * t_[..., 0] + pe[..., 1] * t_[..., 1]
        return out.reshape(t.shape)

    q, k = rope(q), rope(k)
    s = jnp.einsum("bhqd,bhkd->bhqk", q, k) / math.sqrt(DH)
    prob = jax.nn.softmax(s, axis=-1)
    attn = jnp.einsum("bhqk,bhkd->bhqd", prob, v)
    attn = attn.transpose(0, 2, 1, 3).reshape(B, L, D)

    h1 = _gelu_tanh(x_mod @ params["wm1"] + params["bm1"][0])
    mlp_out = h1 @ params["wm2"] + params["bm2"][0]

    out = jnp.concatenate([attn, _gelu_tanh(mlp_out)], axis=-1) @ params["w2"] + params["b2"][0]
    return x + gate * out


# ------------------------------------ main --------------------------------------
if __name__ == "__main__":
    key = jax.random.PRNGKey(0)
    ks = jax.random.split(key, 16)

    x = jax.random.normal(ks[0], (B, L, D), jnp.float32)
    vec = jax.random.normal(ks[1], (B, D), jnp.float32)

    # Flux-style RoPE tensor pe: (1, 1, L, DH//2, 2, 2)
    pos = jnp.arange(L, dtype=jnp.float32)
    idx = jnp.arange(DH // 2, dtype=jnp.float32)
    freqs = pos[:, None] / (10000.0 ** (2.0 * idx[None, :] / DH))
    cos, sin = jnp.cos(freqs), jnp.sin(freqs)
    pe = jnp.stack([jnp.stack([cos, -sin], -1), jnp.stack([sin, cos], -1)], -2)[None, None]

    def w(k, shape):
        return 0.02 * jax.random.normal(k, shape, jnp.float32)

    params = {
        "w_mod": w(ks[2], (D, 3 * D)), "b_mod": w(ks[3], (1, 3 * D)),
        "w1": w(ks[4], (D, 3 * D)),    "b1": w(ks[5], (1, 3 * D)),
        "wm1": w(ks[6], (D, M)),       "bm1": w(ks[7], (1, M)),
        "wm2": w(ks[8], (M, D)),       "bm2": w(ks[9], (1, D)),
        "w2": w(ks[10], (2 * D, D)),   "b2": w(ks[11], (1, D)),
        "wq": jnp.ones((1, DH), jnp.float32),   # RMSNorm weights init to 1 (as PyTorch)
        "wk": jnp.ones((1, DH), jnp.float32),
    }

    out = jax.block_until_ready(single_stream_block(x, vec, pe, params))
    ref = jax.block_until_ready(reference_forward(x, vec, pe, params))

    assert out.shape == (B, L, D)
    assert jnp.allclose(out, ref, atol=1e-3, rtol=1e-3), float(jnp.max(jnp.abs(out - ref)))
    print("KERNEL_OK")
</pallas_src>

<mosaic_0001>
module attributes {stable_mosaic.version = 11 : i64} {
  func.func @single_stream_kernel(%arg0: memref<16x32xf32, #tpu.memory_space<vmem>>, %arg1: memref<16x32xf32, #tpu.memory_space<vmem>>, %arg2: memref<32x96xf32, #tpu.memory_space<vmem>>, %arg3: memref<1x96xf32, #tpu.memory_space<vmem>>, %arg4: memref<32x224xf32, #tpu.memory_space<vmem>>, %arg5: memref<1x224xf32, #tpu.memory_space<vmem>>, %arg6: memref<64x32xf32, #tpu.memory_space<vmem>>, %arg7: memref<1x32xf32, #tpu.memory_space<vmem>>, %arg8: memref<32x128xf32, #tpu.memory_space<vmem>>, %arg9: memref<32x32xf32, #tpu.memory_space<vmem>>, %arg10: memref<1x32xf32, #tpu.memory_space<vmem>>, %arg11: memref<32x32xf32, #tpu.memory_space<vmem>>, %arg12: memref<16x32xf32, #tpu.memory_space<vmem>>, %arg13: memref<16x32xf32, #tpu.memory_space<vmem>>, %arg14: memref<16x32xf32, #tpu.memory_space<vmem>>, %arg15: memref<16x32xf32, #tpu.memory_space<vmem>>, %arg16: memref<16x16xf32, #tpu.memory_space<vmem>>, %arg17: memref<16x32xf32, #tpu.memory_space<vmem>>) attributes {dimension_semantics = [], scalar_prefetch = 0 : i64, scratch_operands = 0 : i64, tpu.core_type = #tpu.core_type<tc>} {
    %c0 = arith.constant 0 : index
    %c0_0 = arith.constant 0 : index
    %0 = vector.load %arg0[%c0, %c0_0] : memref<16x32xf32, #tpu.memory_space<vmem>>, vector<16x32xf32>
    %c0_1 = arith.constant 0 : index
    %c0_2 = arith.constant 0 : index
    %1 = vector.load %arg1[%c0_1, %c0_2] : memref<16x32xf32, #tpu.memory_space<vmem>>, vector<16x32xf32>
    %2 = arith.negf %1 : vector<16x32xf32>
    %3 = math.exp %2 : vector<16x32xf32>
    %cst = arith.constant 1.000000e+00 : f32
    %4 = vector.broadcast %cst : f32 to vector<16x32xf32>
    %5 = arith.addf %4, %3 : vector<16x32xf32>
    %6 = arith.divf %4, %5 : vector<16x32xf32>
    %7 = arith.mulf %1, %6 : vector<16x32xf32>
    %c0_3 = arith.constant 0 : index
    %c0_4 = arith.constant 0 : index
    %8 = vector.load %arg2[%c0_3, %c0_4] : memref<32x96xf32, #tpu.memory_space<vmem>>, vector<32x96xf32>
    %cst_5 = arith.constant dense<0.000000e+00> : vector<16x96xf32>
    %9 = tpu.matmul %7, %8, %cst_5 {dimension_numbers = #tpu.dot_dimension_numbers<[1], [0], [0], [1], [0, 0, 1, 1], [], []>} : vector<16x32xf32>, vector<32x96xf32>, vector<16x96xf32> -> vector<16x96xf32>
    %c0_6 = arith.constant 0 : index
    %c0_7 = arith.constant 0 : index
    %10 = vector.load %arg3[%c0_6, %c0_7] : memref<1x96xf32, #tpu.memory_space<vmem>>, vector<1x96xf32>
    %11 = vector.broadcast %10 : vector<1x96xf32> to vector<16x96xf32>
    %12 = arith.addf %9, %11 : vector<16x96xf32>
    %13 = vector.extract_strided_slice %12 {offsets = [0, 0], sizes = [16, 32], strides = [1, 1]} : vector<16x96xf32> to vector<16x32xf32>
    %14 = vector.extract_strided_slice %12 {offsets = [0, 32], sizes = [16, 32], strides = [1, 1]} : vector<16x96xf32> to vector<16x32xf32>
    %15 = vector.extract_strided_slice %12 {offsets = [0, 64], sizes = [16, 32], strides = [1, 1]} : vector<16x96xf32> to vector<16x32xf32>
    %cst_8 = arith.constant dense<0.000000e+00> : vector<16xf32>
    %16 = vector.multi_reduction <add>, %0, %cst_8 [1] : vector<16x32xf32> to vector<16xf32>
    %17 = vector.shape_cast %16 : vector<16xf32> to vector<16x1xf32>
    %cst_9 = arith.constant 3.200000e+01 : f32
    %18 = vector.broadcast %cst_9 : f32 to vector<16x1xf32>
    %19 = arith.divf %17, %18 : vector<16x1xf32>
    %20 = vector.broadcast %19 : vector<16x1xf32> to vector<16x32xf32>
    %21 = arith.subf %0, %20 : vector<16x32xf32>
    %22 = arith.mulf %21, %21 : vector<16x32xf32>
    %cst_10 = arith.constant dense<0.000000e+00> : vector<16xf32>
    %23 = vector.multi_reduction <add>, %22, %cst_10 [1] : vector<16x32xf32> to vector<16xf32>
    %24 = vector.shape_cast %23 : vector<16xf32> to vector<16x1xf32>
    %cst_11 = arith.constant 3.200000e+01 : f32
    %25 = vector.broadcast %cst_11 : f32 to vector<16x1xf32>
    %26 = arith.divf %24, %25 : vector<16x1xf32>
    %27 = vector.broadcast %19 : vector<16x1xf32> to vector<16x32xf32>
    %28 = arith.subf %0, %27 : vector<16x32xf32>
    %cst_12 = arith.constant 9.99999997E-7 : f32
    %29 = vector.broadcast %cst_12 : f32 to vector<16x1xf32>
    %30 = arith.addf %26, %29 : vector<16x1xf32>
    %31 = math.rsqrt %30 : vector<16x1xf32>
    %32 = vector.broadcast %31 : vector<16x1xf32> to vector<16x32xf32>
    %33 = arith.mulf %28, %32 : vector<16x32xf32>
    %cst_13 = arith.constant 1.000000e+00 : f32
    %34 = vector.broadcast %cst_13 : f32 to vector<16x32xf32>
    %35 = arith.addf %34, %14 : vector<16x32xf32>
    %36 = arith.mulf %35, %33 : vector<16x32xf32>
    %37 = arith.addf %36, %13 : vector<16x32xf32>
    %c0_14 = arith.constant 0 : index
    %c0_15 = arith.constant 0 : index
    %38 = vector.load %arg4[%c0_14, %c0_15] : memref<32x224xf32, #tpu.memory_space<vmem>>, vector<32x224xf32>
    %cst_16 = arith.constant dense<0.000000e+00> : vector<16x224xf32>
    %39 = tpu.matmul %37, %38, %cst_16 {dimension_numbers = #tpu.dot_dimension_numbers<[1], [0], [0], [1], [0, 0, 1, 1], [], []>} : vector<16x32xf32>, vector<32x224xf32>, vector<16x224xf32> -> vector<16x224xf32>
    %c0_17 = arith.constant 0 : index
    %c0_18 = arith.constant 0 : index
    %40 = vector.load %arg5[%c0_17, %c0_18] : memref<1x224xf32, #tpu.memory_space<vmem>>, vector<1x224xf32>
    %41 = vector.broadcast %40 : vector<1x224xf32> to vector<16x224xf32>
    %42 = arith.addf %39, %41 : vector<16x224xf32>
    %43 = vector.extract_strided_slice %42 {offsets = [0, 0], sizes = [16, 32], strides = [1, 1]} : vector<16x224xf32> to vector<16x32xf32>
    %44 = vector.extract_strided_slice %42 {offsets = [0, 32], sizes = [16, 32], strides = [1, 1]} : vector<16x224xf32> to vector<16x32xf32>
    %45 = vector.extract_strided_slice %42 {offsets = [0, 64], sizes = [16, 32], strides = [1, 1]} : vector<16x224xf32> to vector<16x32xf32>
    %46 = vector.extract_strided_slice %42 {offsets = [0, 96], sizes = [16, 32], strides = [1, 1]} : vector<16x224xf32> to vector<16x32xf32>
    %47 = vector.extract_strided_slice %42 {offsets = [0, 128], sizes = [16, 32], strides = [1, 1]} : vector<16x224xf32> to vector<16x32xf32>
    %48 = vector.extract_strided_slice %42 {offsets = [0, 160], sizes = [16, 64], strides = [1, 1]} : vector<16x224xf32> to vector<16x64xf32>
    %49 = arith.mulf %43, %43 : vector<16x32xf32>
    %c0_19 = arith.constant 0 : index
    %c0_20 = arith.constant 0 : index
    %50 = vector.load %arg11[%c0_19, %c0_20] : memref<32x32xf32, #tpu.memory_space<vmem>>, vector<32x32xf32>
    %cst_21 = arith.constant dense<0.000000e+00> : vector<16x32xf32>
    %51 = tpu.matmul %49, %50, %cst_21 {dimension_numbers = #tpu.dot_dimension_numbers<[1], [0], [0], [1], [0, 0, 1, 1], [], []>} : vector<16x32xf32>, vector<32x32xf32>, vector<16x32xf32> -> vector<16x32xf32>
    %cst_22 = arith.constant 1.1920929E-7 : f32
    %52 = vector.broadcast %cst_22 : f32 to vector<16x32xf32>
    %53 = arith.addf %51, %52 : vector<16x32xf32>
    %54 = math.rsqrt %53 : vector<16x32xf32>
    %55 = arith.mulf %44, %44 : vector<16x32xf32>
    %c0_23 = arith.constant 0 : index
    %c0_24 = arith.constant 0 : index
    %56 = vector.load %arg11[%c0_23, %c0_24] : memref<32x32xf32, #tpu.memory_space<vmem>>, vector<32x32xf32>
    %cst_25 = arith.constant dense<0.000000e+00> : vector<16x32xf32>
    %57 = tpu.matmul %55, %56, %cst_25 {dimension_numbers = #tpu.dot_dimension_numbers<[1], [0], [0], [1], [0, 0, 1, 1], [], []>} : vector<16x32xf32>, vector<32x32xf32>, vector<16x32xf32> -> vector<16x32xf32>
    %cst_26 = arith.constant 1.1920929E-7 : f32
    %58 = vector.broadcast %cst_26 : f32 to vector<16x32xf32>
    %59 = arith.addf %57, %58 : vector<16x32xf32>
    %60 = math.rsqrt %59 : vector<16x32xf32>
    %c0_27 = arith.constant 0 : index
    %c0_28 = arith.constant 0 : index
    %61 = vector.load %arg12[%c0_27, %c0_28] : memref<16x32xf32, #tpu.memory_space<vmem>>, vector<16x32xf32>
    %62 = arith.mulf %43, %61 : vector<16x32xf32>
    %c0_29 = arith.constant 0 : index
    %c0_30 = arith.constant 0 : index
    %63 = vector.load %arg13[%c0_29, %c0_30] : memref<16x32xf32, #tpu.memory_space<vmem>>, vector<16x32xf32>
    %64 = arith.mulf %46, %63 : vector<16x32xf32>
    %65 = arith.addf %62, %64 : vector<16x32xf32>
    %66 = arith.mulf %54, %65 : vector<16x32xf32>
    %c0_31 = arith.constant 0 : index
    %c0_32 = arith.constant 0 : index
    %67 = vector.load %arg14[%c0_31, %c0_32] : memref<16x32xf32, #tpu.memory_space<vmem>>, vector<16x32xf32>
    %68 = arith.mulf %44, %67 : vector<16x32xf32>
    %c0_33 = arith.constant 0 : index
    %c0_34 = arith.constant 0 : index
    %69 = vector.load %arg15[%c0_33, %c0_34] : memref<16x32xf32, #tpu.memory_space<vmem>>, vector<16x32xf32>
    %70 = arith.mulf %47, %69 : vector<16x32xf32>
    %71 = arith.addf %68, %70 : vector<16x32xf32>
    %72 = arith.mulf %60, %71 : vector<16x32xf32>
    %cst_35 = arith.constant 5.000000e-01 : f32
    %73 = vector.broadcast %cst_35 : f32 to vector<16x64xf32>
    %74 = arith.mulf %73, %48 : vector<16x64xf32>
    %cst_36 = arith.constant 4.471500e-02 : f32
    %75 = vector.broadcast %cst_36 : f32 to vector<16x64xf32>
    %76 = arith.mulf %75, %48 : vector<16x64xf32>
    %77 = arith.mulf %76, %48 : vector<16x64xf32>
    %78 = arith.mulf %77, %48 : vector<16x64xf32>
    %79 = arith.addf %48, %78 : vector<16x64xf32>
    %cst_37 = arith.constant 0.797884583 : f32
    %80 = vector.broadcast %cst_37 : f32 to vector<16x64xf32>
    %81 = arith.mulf %80, %79 : vector<16x64xf32>
    %82 = math.tanh %81 : vector<16x64xf32>
    %cst_38 = arith.constant 1.000000e+00 : f32
    %83 = vector.broadcast %cst_38 : f32 to vector<16x64xf32>
    %84 = arith.addf %83, %82 : vector<16x64xf32>
    %85 = arith.mulf %74, %84 : vector<16x64xf32>
    %c0_39 = arith.constant 0 : index
    %c0_40 = arith.constant 0 : index
    %86 = vector.load %arg6[%c0_39, %c0_40] : memref<64x32xf32, #tpu.memory_space<vmem>>, vector<64x32xf32>
    %cst_41 = arith.constant dense<0.000000e+00> : vector<16x32xf32>
    %87 = tpu.matmul %85, %86, %cst_41 {dimension_numbers = #tpu.dot_dimension_numbers<[1], [0], [0], [1], [0, 0, 1, 1], [], []>} : vector<16x64xf32>, vector<64x32xf32>, vector<16x32xf32> -> vector<16x32xf32>
    %c0_42 = arith.constant 0 : index
    %c0_43 = arith.constant 0 : index
    %88 = vector.load %arg7[%c0_42, %c0_43] : memref<1x32xf32, #tpu.memory_space<vmem>>, vector<1x32xf32>
    %89 = vector.broadcast %88 : vector<1x32xf32> to vector<16x32xf32>
    %90 = arith.addf %87, %89 : vector<16x32xf32>
    %cst_44 = arith.constant 5.000000e-01 : f32
    %91 = vector.broadcast %cst_44 : f32 to vector<16x32xf32>
    %92 = arith.mulf %91, %90 : vector<16x32xf32>
    %cst_45 = arith.constant 4.471500e-02 : f32
    %93 = vector.broadcast %cst_45 : f32 to vector<16x32xf32>
    %94 = arith.mulf %93, %90 : vector<16x32xf32>
    %95 = arith.mulf %94, %90 : vector<16x32xf32>
    %96 = arith.mulf %95, %90 : vector<16x32xf32>
    %97 = arith.addf %90, %96 : vector<16x32xf32>
    %cst_46 = arith.constant 0.797884583 : f32
    %98 = vector.broadcast %cst_46 : f32 to vector<16x32xf32>
    %99 = arith.mulf %98, %97 : vector<16x32xf32>
    %100 = math.tanh %99 : vector<16x32xf32>
    %cst_47 = arith.constant 1.000000e+00 : f32
    %101 = vector.broadcast %cst_47 : f32 to vector<16x32xf32>
    %102 = arith.addf %101, %100 : vector<16x32xf32>
    %103 = arith.mulf %92, %102 : vector<16x32xf32>
    %c0_48 = arith.constant 0 : index
    %c0_49 = arith.constant 0 : index
    %104 = vector.load %arg9[%c0_48, %c0_49] : memref<32x32xf32, #tpu.memory_space<vmem>>, vector<32x32xf32>
    %cst_50 = arith.constant dense<0.000000e+00> : vector<16x32xf32>
    %105 = tpu.matmul %103, %104, %cst_50 {dimension_numbers = #tpu.dot_dimension_numbers<[1], [0], [0], [1], [0, 0, 1, 1], [], []>} : vector<16x32xf32>, vector<32x32xf32>, vector<16x32xf32> -> vector<16x32xf32>
    %c0_51 = arith.constant 0 : index
    %c0_52 = arith.constant 0 : index
    %106 = vector.load %arg10[%c0_51, %c0_52] : memref<1x32xf32, #tpu.memory_space<vmem>>, vector<1x32xf32>
    %107 = vector.broadcast %106 : vector<1x32xf32> to vector<16x32xf32>
    %108 = arith.addf %105, %107 : vector<16x32xf32>
    %c0_53 = arith.constant 0 : index
    %c0_54 = arith.constant 0 : index
    %109 = vector.load %arg8[%c0_53, %c0_54] : memref<32x128xf32, #tpu.memory_space<vmem>>, vector<32x128xf32>
    %cst_55 = arith.constant dense<0.000000e+00> : vector<16x128xf32>
    %110 = tpu.matmul %45, %109, %cst_55 {dimension_numbers = #tpu.dot_dimension_numbers<[1], [0], [0], [1], [0, 0, 1, 1], [], []>} : vector<16x32xf32>, vector<32x128xf32>, vector<16x128xf32> -> vector<16x128xf32>
    %c0_56 = arith.constant 0 : index
    %c0_57 = arith.constant 0 : index
    %111 = vector.load %arg16[%c0_56, %c0_57] : memref<16x16xf32, #tpu.memory_space<vmem>>, vector<16x16xf32>
    %112 = vector.extract_strided_slice %66 {offsets = [0, 0], sizes = [16, 8], strides = [1, 1]} : vector<16x32xf32> to vector<16x8xf32>
    %113 = vector.extract_strided_slice %72 {offsets = [0, 0], sizes = [16, 8], strides = [1, 1]} : vector<16x32xf32> to vector<16x8xf32>
    %cst_58 = arith.constant dense<0.000000e+00> : vector<16x16xf32>
    %114 = tpu.matmul %112, %113, %cst_58 {dimension_numbers = #tpu.dot_dimension_numbers<[1], [1], [0], [0], [0, 0, 1, 0], [], []>} : vector<16x8xf32>, vector<16x8xf32>, vector<16x16xf32> -> vector<16x16xf32>
    %cst_59 = arith.constant 0.353553385 : f32
    %115 = vector.broadcast %cst_59 : f32 to vector<16x16xf32>
    %116 = arith.mulf %114, %115 : vector<16x16xf32>
    %117 = arith.addf %116, %111 : vector<16x16xf32>
    %cst_60 = arith.constant dense<0xFF800000> : vector<16xf32>
    %118 = vector.multi_reduction <maximumf>, %117, %cst_60 [1] : vector<16x16xf32> to vector<16xf32>
    %119 = vector.shape_cast %118 : vector<16xf32> to vector<16x1xf32>
    %120 = vector.broadcast %119 : vector<16x1xf32> to vector<16x16xf32>
    %121 = arith.subf %117, %120 : vector<16x16xf32>
    %122 = math.exp %121 : vector<16x16xf32>
    %cst_61 = arith.constant dense<0.000000e+00> : vector<16xf32>
    %123 = vector.multi_reduction <add>, %122, %cst_61 [1] : vector<16x16xf32> to vector<16xf32>
    %124 = vector.shape_cast %123 : vector<16xf32> to vector<16x1xf32>
    %125 = tpu.reciprocal %124 {approx = true} : vector<16x1xf32> -> vector<16x1xf32>
    %126 = vector.broadcast %125 : vector<16x1xf32> to vector<16x16xf32>
    %127 = arith.mulf %122, %126 : vector<16x16xf32>
    %128 = vector.extract_strided_slice %110 {offsets = [0, 0], sizes = [16, 32], strides = [1, 1]} : vector<16x128xf32> to vector<16x32xf32>
    %cst_62 = arith.constant dense<0.000000e+00> : vector<16x32xf32>
    %129 = tpu.matmul %127, %128, %cst_62 {dimension_numbers = #tpu.dot_dimension_numbers<[1], [0], [0], [1], [0, 0, 1, 1], [], []>} : vector<16x16xf32>, vector<16x32xf32>, vector<16x32xf32> -> vector<16x32xf32>
    %130 = arith.addf %108, %129 : vector<16x32xf32>
    %131 = vector.extract_strided_slice %66 {offsets = [0, 8], sizes = [16, 8], strides = [1, 1]} : vector<16x32xf32> to vector<16x8xf32>
    %132 = vector.extract_strided_slice %72 {offsets = [0, 8], sizes = [16, 8], strides = [1, 1]} : vector<16x32xf32> to vector<16x8xf32>
    %cst_63 = arith.constant dense<0.000000e+00> : vector<16x16xf32>
    %133 = tpu.matmul %131, %132, %cst_63 {dimension_numbers = #tpu.dot_dimension_numbers<[1], [1], [0], [0], [0, 0, 1, 0], [], []>} : vector<16x8xf32>, vector<16x8xf32>, vector<16x16xf32> -> vector<16x16xf32>
    %cst_64 = arith.constant 0.353553385 : f32
    %134 = vector.broadcast %cst_64 : f32 to vector<16x16xf32>
    %135 = arith.mulf %133, %134 : vector<16x16xf32>
    %136 = arith.addf %135, %111 : vector<16x16xf32>
    %cst_65 = arith.constant dense<0xFF800000> : vector<16xf32>
    %137 = vector.multi_reduction <maximumf>, %136, %cst_65 [1] : vector<16x16xf32> to vector<16xf32>
    %138 = vector.shape_cast %137 : vector<16xf32> to vector<16x1xf32>
    %139 = vector.broadcast %138 : vector<16x1xf32> to vector<16x16xf32>
    %140 = arith.subf %136, %139 : vector<16x16xf32>
    %141 = math.exp %140 : vector<16x16xf32>
    %cst_66 = arith.constant dense<0.000000e+00> : vector<16xf32>
    %142 = vector.multi_reduction <add>, %141, %cst_66 [1] : vector<16x16xf32> to vector<16xf32>
    %143 = vector.shape_cast %142 : vector<16xf32> to vector<16x1xf32>
    %144 = tpu.reciprocal %143 {approx = true} : vector<16x1xf32> -> vector<16x1xf32>
    %145 = vector.broadcast %144 : vector<16x1xf32> to vector<16x16xf32>
    %146 = arith.mulf %141, %145 : vector<16x16xf32>
    %147 = vector.extract_strided_slice %110 {offsets = [0, 32], sizes = [16, 32], strides = [1, 1]} : vector<16x128xf32> to vector<16x32xf32>
    %cst_67 = arith.constant dense<0.000000e+00> : vector<16x32xf32>
    %148 = tpu.matmul %146, %147, %cst_67 {dimension_numbers = #tpu.dot_dimension_numbers<[1], [0], [0], [1], [0, 0, 1, 1], [], []>} : vector<16x16xf32>, vector<16x32xf32>, vector<16x32xf32> -> vector<16x32xf32>
    %149 = arith.addf %130, %148 : vector<16x32xf32>
    %150 = vector.extract_strided_slice %66 {offsets = [0, 16], sizes = [16, 8], strides = [1, 1]} : vector<16x32xf32> to vector<16x8xf32>
    %151 = vector.extract_strided_slice %72 {offsets = [0, 16], sizes = [16, 8], strides = [1, 1]} : vector<16x32xf32> to vector<16x8xf32>
    %cst_68 = arith.constant dense<0.000000e+00> : vector<16x16xf32>
    %152 = tpu.matmul %150, %151, %cst_68 {dimension_numbers = #tpu.dot_dimension_numbers<[1], [1], [0], [0], [0, 0, 1, 0], [], []>} : vector<16x8xf32>, vector<16x8xf32>, vector<16x16xf32> -> vector<16x16xf32>
    %cst_69 = arith.constant 0.353553385 : f32
    %153 = vector.broadcast %cst_69 : f32 to vector<16x16xf32>
    %154 = arith.mulf %152, %153 : vector<16x16xf32>
    %155 = arith.addf %154, %111 : vector<16x16xf32>
    %cst_70 = arith.constant dense<0xFF800000> : vector<16xf32>
    %156 = vector.multi_reduction <maximumf>, %155, %cst_70 [1] : vector<16x16xf32> to vector<16xf32>
    %157 = vector.shape_cast %156 : vector<16xf32> to vector<16x1xf32>
    %158 = vector.broadcast %157 : vector<16x1xf32> to vector<16x16xf32>
    %159 = arith.subf %155, %158 : vector<16x16xf32>
    %160 = math.exp %159 : vector<16x16xf32>
    %cst_71 = arith.constant dense<0.000000e+00> : vector<16xf32>
    %161 = vector.multi_reduction <add>, %160, %cst_71 [1] : vector<16x16xf32> to vector<16xf32>
    %162 = vector.shape_cast %161 : vector<16xf32> to vector<16x1xf32>
    %163 = tpu.reciprocal %162 {approx = true} : vector<16x1xf32> -> vector<16x1xf32>
    %164 = vector.broadcast %163 : vector<16x1xf32> to vector<16x16xf32>
    %165 = arith.mulf %160, %164 : vector<16x16xf32>
    %166 = vector.extract_strided_slice %110 {offsets = [0, 64], sizes = [16, 32], strides = [1, 1]} : vector<16x128xf32> to vector<16x32xf32>
    %cst_72 = arith.constant dense<0.000000e+00> : vector<16x32xf32>
    %167 = tpu.matmul %165, %166, %cst_72 {dimension_numbers = #tpu.dot_dimension_numbers<[1], [0], [0], [1], [0, 0, 1, 1], [], []>} : vector<16x16xf32>, vector<16x32xf32>, vector<16x32xf32> -> vector<16x32xf32>
    %168 = arith.addf %149, %167 : vector<16x32xf32>
    %169 = vector.extract_strided_slice %66 {offsets = [0, 24], sizes = [16, 8], strides = [1, 1]} : vector<16x32xf32> to vector<16x8xf32>
    %170 = vector.extract_strided_slice %72 {offsets = [0, 24], sizes = [16, 8], strides = [1, 1]} : vector<16x32xf32> to vector<16x8xf32>
    %cst_73 = arith.constant dense<0.000000e+00> : vector<16x16xf32>
    %171 = tpu.matmul %169, %170, %cst_73 {dimension_numbers = #tpu.dot_dimension_numbers<[1], [1], [0], [0], [0, 0, 1, 0], [], []>} : vector<16x8xf32>, vector<16x8xf32>, vector<16x16xf32> -> vector<16x16xf32>
    %cst_74 = arith.constant 0.353553385 : f32
    %172 = vector.broadcast %cst_74 : f32 to vector<16x16xf32>
    %173 = arith.mulf %171, %172 : vector<16x16xf32>
    %174 = arith.addf %173, %111 : vector<16x16xf32>
    %cst_75 = arith.constant dense<0xFF800000> : vector<16xf32>
    %175 = vector.multi_reduction <maximumf>, %174, %cst_75 [1] : vector<16x16xf32> to vector<16xf32>
    %176 = vector.shape_cast %175 : vector<16xf32> to vector<16x1xf32>
    %177 = vector.broadcast %176 : vector<16x1xf32> to vector<16x16xf32>
    %178 = arith.subf %174, %177 : vector<16x16xf32>
    %179 = math.exp %178 : vector<16x16xf32>
    %cst_76 = arith.constant dense<0.000000e+00> : vector<16xf32>
    %180 = vector.multi_reduction <add>, %179, %cst_76 [1] : vector<16x16xf32> to vector<16xf32>
    %181 = vector.shape_cast %180 : vector<16xf32> to vector<16x1xf32>
    %182 = tpu.reciprocal %181 {approx = true} : vector<16x1xf32> -> vector<16x1xf32>
    %183 = vector.broadcast %182 : vector<16x1xf32> to vector<16x16xf32>
    %184 = arith.mulf %179, %183 : vector<16x16xf32>
    %185 = vector.extract_strided_slice %110 {offsets = [0, 96], sizes = [16, 32], strides = [1, 1]} : vector<16x128xf32> to vector<16x32xf32>
    %cst_77 = arith.constant dense<0.000000e+00> : vector<16x32xf32>
    %186 = tpu.matmul %184, %185, %cst_77 {dimension_numbers = #tpu.dot_dimension_numbers<[1], [0], [0], [1], [0, 0, 1, 1], [], []>} : vector<16x16xf32>, vector<16x32xf32>, vector<16x32xf32> -> vector<16x32xf32>
    %187 = arith.addf %168, %186 : vector<16x32xf32>
    %188 = arith.mulf %15, %187 : vector<16x32xf32>
    %189 = arith.addf %0, %188 : vector<16x32xf32>
    %c0_78 = arith.constant 0 : index
    %c0_79 = arith.constant 0 : index
    %190 = vector.load %arg17[%c0_78, %c0_79] : memref<16x32xf32, #tpu.memory_space<vmem>>, vector<16x32xf32>
    tpu.vector_store %arg17[%c0_78, %c0_79], %189 {strides = array<i32>} : memref<16x32xf32, #tpu.memory_space<vmem>>, vector<16x32xf32>,
    return
  }
}

</mosaic_0001>

<llo_original>
// kernel: tpu_custom_call.1
$region0: #{tpu_custom_call.1}
  #allocation0 [shape = 'u32[]', space=smem, size = 0x4, offset = 0x4, fixed_abs, tag = 'smem constant byte address 0x4 - core index']
  #allocation1 [shape = 'u32[144,128]{1,0:T(1,128)}', space=vmem, size = 0x12000, scoped, tag = 'internal scratch']
  %s0 = inlined_call_operand.hbm [shape: f32[16,32], index: 0, kind: input, shape index: {}]
  %s1 = inlined_call_operand.hbm [shape: f32[16,32], index: 1, kind: input, shape index: {}]
  %s2 = inlined_call_operand.vmem [shape: f32[32,96], index: 2, kind: input, shape index: {}]
  %s3 = inlined_call_operand.vmem [shape: f32[1,96], index: 3, kind: input, shape index: {}]
  %s4 = inlined_call_operand.vmem [shape: f32[32,224], index: 4, kind: input, shape index: {}]
  %s5 = inlined_call_operand.hbm [shape: f32[1,224], index: 5, kind: input, shape index: {}]
  %s6 = inlined_call_operand.vmem [shape: f32[64,32], index: 6, kind: input, shape index: {}]
  %s7 = inlined_call_operand.hbm [shape: f32[1,32], index: 7, kind: input, shape index: {}]
  %s8 = inlined_call_operand.hbm [shape: f32[32,128], index: 8, kind: input, shape index: {}]
  %s9 = inlined_call_operand.vmem [shape: f32[32,32], index: 9, kind: input, shape index: {}]
  %s10 = inlined_call_operand.hbm [shape: f32[1,32], index: 10, kind: input, shape index: {}]
  %s11 = inlined_call_operand.hbm [shape: f32[32,32], index: 11, kind: input, shape index: {}]
  %s12 = inlined_call_operand.hbm [shape: f32[16,32], index: 12, kind: input, shape index: {}]
  %s13 = inlined_call_operand.vmem [shape: f32[16,32], index: 13, kind: input, shape index: {}]
  %s14 = inlined_call_operand.hbm [shape: f32[16,32], index: 14, kind: input, shape index: {}]
  %s15 = inlined_call_operand.hbm [shape: f32[16,32], index: 15, kind: input, shape index: {}]
  %s16 = inlined_call_operand.hbm [shape: f32[16,16], index: 16, kind: input, shape index: {}]
  %s17 = inlined_call_operand.hbm [shape: f32[16,32], index: 17, kind: output, shape index: {}]
  %s18 = sld [smem:[#allocation0]]
  $region122: #{tpu_custom_call.1} parent=0
    _
  %s20 = ssub.s32 1, %s18
  %s21 = scalar_select 0, %s20, %s18
  $region1: #{tpu_custom_call.1} parent=0
    #allocation2 [shape = 'u8[8192]{0}', space=vmem, size = 0x2000, scoped, tag = 'input window, operand 0, single buffered']
    #allocation3 [shape = 's32[1]{0}', space=sflag, size = 0x4, scoped, tag = 'scoped memory for tpu_custom_call.1']
    #allocation4 [shape = 's32[1]{0}', space=sflag, size = 0x4, scoped, tag = 'scoped memory for tpu_custom_call.1']
    #allocation5 [shape = 'u8[8192]{0}', space=vmem, size = 0x2000, scoped, tag = 'input window, operand 1, single buffered']
    #allocation6 [shape = 's32[1]{0}', space=sflag, size = 0x4, scoped, tag = 'scoped memory for tpu_custom_call.1']
    #allocation7 [shape = 'u8[1024]{0}', space=vmem, size = 0x400, scoped, tag = 'input window, operand 5, single buffered']
    #allocation8 [shape = 'u8[512]{0}', space=vmem, size = 0x400, scoped, tag = 'input window, operand 7, single buffered']
    #allocation9 [shape = 's32[1]{0}', space=sflag, size = 0x4, scoped, tag = 'scoped memory for tpu_custom_call.1']
    #allocation10 [shape = 'u8[16384]{0}', space=vmem, size = 0x4000, scoped, tag = 'input window, operand 8, single buffered']
    #allocation11 [shape = 'u8[512]{0}', space=vmem, size = 0x400, scoped, tag = 'input window, operand 10, single buffered']
    #allocation12 [shape = 's32[1]{0}', space=sflag, size = 0x4, scoped, tag = 'scoped memory for tpu_custom_call.1']
    #allocation13 [shape = 'u8[16384]{0}', space=vmem, size = 0x4000, scoped, tag = 'input window, operand 11, single buffered']
    #allocation14 [shape = 'u8[8192]{0}', space=vmem, size = 0x2000, scoped, tag = 'input window, operand 12, single buffered']
    #allocation15 [shape = 's32[1]{0}', space=sflag, size = 0x4, scoped, tag = 'scoped memory for tpu_custom_call.1']
    #allocation16 [shape = 'u8[8192]{0}', space=vmem, size = 0x2000, scoped, tag = 'input window, operand 14, single buffered']
    #allocation17 [shape = 'u8[8192]{0}', space=vmem, size = 0x2000, scoped, tag = 'input window, operand 15, single buffered']
    #allocation18 [shape = 's32[1]{0}', space=sflag, size = 0x4, scoped, tag = 'scoped memory for tpu_custom_call.1']
    #allocation19 [shape = 'u8[8192]{0}', space=vmem, size = 0x2000, scoped, tag = 'input window, operand 16, single buffered']
    #allocation20 [shape = 'u8[8192]{0}', space=vmem, size = 0x2000, scoped, tag = 'output window, operand 0, single buffered']
    %22 = vsyncpa [#allocation3], 0
    %23 = vsyncpa [#allocation6], 0
    %24 = vsyncpa [#allocation9], 0
    %25 = vsyncpa [#allocation12], 0
    %26 = vsyncpa [#allocation15], 0
    %27 = vsyncpa [#allocation18], 0
    %28 = vsyncpa [#allocation4], 0
    // Predicated region
    $region2: #{tpu_custom_call.1} parent=1 // pred_check
      _
    $region3: #{tpu_custom_call.1} parent=1 // pred_check_branch
      %30 = sbr.rel (0) target = $region5
    $region4: #{tpu_custom_call.1} parent=1 // pred_region
      %s32 = ssub.s32 256, 256
      %33 = vsyncadd [#allocation3], %s32
      %s34 = sshll.u32 [#allocation2], 4
      %s35 = int_to_ptr.vmem [resolvable:$true] %s34
      %40 = dma.hbm_to_vmem [thread:$0]  %s0, 256, %s35, [#allocation3], 128, 128, 8
    $region5: #{tpu_custom_call.1} parent=1 // pred_fallthru
      _
    // Predicated region
    $region6: #{tpu_custom_call.1} parent=1 // pred_check
      _
    $region7: #{tpu_custom_call.1} parent=1 // pred_check_branch
      %42 = sbr.rel (0) target = $region9
    $region8: #{tpu_custom_call.1} parent=1 // pred_region
      %s44 = ssub.s32 256, 256
      %45 = vsyncadd [#allocation6], %s44
      %s46 = sshll.u32 [#allocation5], 4
      %s47 = int_to_ptr.vmem [resolvable:$true] %s46
      %52 = dma.hbm_to_vmem [thread:$0]  %s1, 256, %s47, [#allocation6], 128, 128, 8
    $region9: #{tpu_custom_call.1} parent=1 // pred_fallthru
      _
    // Predicated region
    $region10: #{tpu_custom_call.1} parent=1 // pred_check
      _
    $region11: #{tpu_custom_call.1} parent=1 // pred_check_branch
      %54 = sbr.rel (0) target = $region13
    $region12: #{tpu_custom_call.1} parent=1 // pred_region
      _
    $region13: #{tpu_custom_call.1} parent=1 // pred_fallthru
      _
    // Predicated region
    $region14: #{tpu_custom_call.1} parent=1 // pred_check
      _
    $region15: #{tpu_custom_call.1} parent=1 // pred_check_branch
      %56 = sbr.rel (0) target = $region17
    $region16: #{tpu_custom_call.1} parent=1 // pred_region
      _
    $region17: #{tpu_custom_call.1} parent=1 // pred_fallthru
      _
    // Predicated region
    $region18: #{tpu_custom_call.1} parent=1 // pred_check
      _
    $region19: #{tpu_custom_call.1} parent=1 // pred_check_branch
      %58 = sbr.rel (0) target = $region21
    $region20: #{tpu_custom_call.1} parent=1 // pred_region
      _
    $region21: #{tpu_custom_call.1} parent=1 // pred_fallthru
      _
    // Predicated region
    $region22: #{tpu_custom_call.1} parent=1 // pred_check
      _
    $region23: #{tpu_custom_call.1} parent=1 // pred_check_branch
      %60 = sbr.rel (0) target = $region25
    $region24: #{tpu_custom_call.1} parent=1 // pred_region
      %s62 = ssub.s32 32, 32
      %63 = vsyncadd [#allocation6], %s62
      %s65 = sshll.u32 [#allocation7], 4
      %s66 = int_to_ptr.vmem [resolvable:$true] %s65
      %68 = dma.hbm_to_vmem [thread:$0]  %s5, 32, %s66, [#allocation6]
    $region25: #{tpu_custom_call.1} parent=1 // pred_fallthru
      _
    // Predicated region
    $region26: #{tpu_custom_call.1} parent=1 // pred_check
      _
    $region27: #{tpu_custom_call.1} parent=1 // pred_check_branch
      %70 = sbr.rel (0) target = $region29
    $region28: #{tpu_custom_call.1} parent=1 // pred_region
      _
    $region29: #{tpu_custom_call.1} parent=1 // pred_fallthru
      _
    // Predicated region
    $region30: #{tpu_custom_call.1} parent=1 // pred_check
      _
    $region31: #{tpu_custom_call.1} parent=1 // pred_check_branch
      %72 = sbr.rel (0) target = $region33
    $region32: #{tpu_custom_call.1} parent=1 // pred_region
      %s74 = ssub.s32 16, 16
      %75 = vsyncadd [#allocation9], %s74
      %s77 = sshll.u32 [#allocation8], 4
      %s78 = int_to_ptr.vmem [resolvable:$true] %s77
      %80 = dma.hbm_to_vmem [thread:$0]  %s7, 16, %s78, [#allocation9]
    $region33: #{tpu_custom_call.1} parent=1 // pred_fallthru
      _
    // Predicated region
    $region34: #{tpu_custom_call.1} parent=1 // pred_check
      _
    $region35: #{tpu_custom_call.1} parent=1 // pred_check_branch
      %82 = sbr.rel (0) target = $region37
    $region36: #{tpu_custom_call.1} parent=1 // pred_region
      %s84 = ssub.s32 512, 512
      %85 = vsyncadd [#allocation9], %s84
      %s86 = sshll.u32 [#allocation10], 4
      %s87 = int_to_ptr.vmem [resolvable:$true] %s86
      %92 = dma.hbm_to_vmem [thread:$0]  %s8, 512, %s87, [#allocation9], 128, 128, 8
    $region37: #{tpu_custom_call.1} parent=1 // pred_fallthru
      _
    // Predicated region
    $region38: #{tpu_custom_call.1} parent=1 // pred_check
      _
    $region39: #{tpu_custom_call.1} parent=1 // pred_check_branch
      %94 = sbr.rel (0) target = $region41
    $region40: #{tpu_custom_call.1} parent=1 // pred_region
      _
    $region41: #{tpu_custom_call.1} parent=1 // pred_fallthru
      _
    // Predicated region
    $region42: #{tpu_custom_call.1} parent=1 // pred_check
      _
    $region43: #{tpu_custom_call.1} parent=1 // pred_check_branch
      %96 = sbr.rel (0) target = $region45
    $region44: #{tpu_custom_call.1} parent=1 // pred_region
      %s98 = ssub.s32 16, 16
      %99 = vsyncadd [#allocation12], %s98
      %s101 = sshll.u32 [#allocation11], 4
      %s102 = int_to_ptr.vmem [resolvable:$true] %s101
      %104 = dma.hbm_to_vmem [thread:$0]  %s10, 16, %s102, [#allocation12]
    $region45: #{tpu_custom_call.1} parent=1 // pred_fallthru
      _
    // Predicated region
    $region46: #{tpu_custom_call.1} parent=1 // pred_check
      _
    $region47: #{tpu_custom_call.1} parent=1 // pred_check_branch
      %106 = sbr.rel (0) target = $region49
    $region48: #{tpu_custom_call.1} parent=1 // pred_region
      %s108 = ssub.s32 512, 512
      %109 = vsyncadd [#allocation12], %s108
      %s110 = sshll.u32 [#allocation13], 4
      %s111 = int_to_ptr.vmem [resolvable:$true] %s110
      %116 = dma.hbm_to_vmem [thread:$0]  %s11, 512, %s111, [#allocation12], 128, 128, 8
    $region49: #{tpu_custom_call.1} parent=1 // pred_fallthru
      _
    // Predicated region
    $region50: #{tpu_custom_call.1} parent=1 // pred_check
      _
    $region51: #{tpu_custom_call.1} parent=1 // pred_check_branch
      %118 = sbr.rel (0) target = $region53
    $region52: #{tpu_custom_call.1} parent=1 // pred_region
      %s120 = ssub.s32 256, 256
      %121 = vsyncadd [#allocation15], %s120
      %s122 = sshll.u32 [#allocation14], 4
      %s123 = int_to_ptr.vmem [resolvable:$true] %s122
      %128 = dma.hbm_to_vmem [thread:$0]  %s12, 256, %s123, [#allocation15], 128, 128, 8
    $region53: #{tpu_custom_call.1} parent=1 // pred_fallthru
      _
    // Predicated region
    $region54: #{tpu_custom_call.1} parent=1 // pred_check
      _
    $region55: #{tpu_custom_call.1} parent=1 // pred_check_branch
      %130 = sbr.rel (0) target = $region57
    $region56: #{tpu_custom_call.1} parent=1 // pred_region
      _
    $region57: #{tpu_custom_call.1} parent=1 // pred_fallthru
      _
    // Predicated region
    $region58: #{tpu_custom_call.1} parent=1 // pred_check
      _
    $region59: #{tpu_custom_call.1} parent=1 // pred_check_branch
      %132 = sbr.rel (0) target = $region61
    $region60: #{tpu_custom_call.1} parent=1 // pred_region
      %s134 = ssub.s32 256, 256
      %135 = vsyncadd [#allocation15], %s134
      %s136 = sshll.u32 [#allocation16], 4
      %s137 = int_to_ptr.vmem [resolvable:$true] %s136
      %142 = dma.hbm_to_vmem [thread:$0]  %s14, 256, %s137, [#allocation15], 128, 128, 8
    $region61: #{tpu_custom_call.1} parent=1 // pred_fallthru
      _
    // Predicated region
    $region62: #{tpu_custom_call.1} parent=1 // pred_check
      _
    $region63: #{tpu_custom_call.1} parent=1 // pred_check_branch
      %144 = sbr.rel (0) target = $region65
    $region64: #{tpu_custom_call.1} parent=1 // pred_region
      %s146 = ssub.s32 256, 256
      %147 = vsyncadd [#allocation18], %s146
      %s148 = sshll.u32 [#allocation17], 4
      %s149 = int_to_ptr.vmem [resolvable:$true] %s148
      %154 = dma.hbm_to_vmem [thread:$0]  %s15, 256, %s149, [#allocation18], 128, 128, 8
    $region65: #{tpu_custom_call.1} parent=1 // pred_fallthru
      _
    // Predicated region
    $region66: #{tpu_custom_call.1} parent=1 // pred_check
      _
    $region67: #{tpu_custom_call.1} parent=1 // pred_check_branch
      %156 = sbr.rel (0) target = $region69
    $region68: #{tpu_custom_call.1} parent=1 // pred_region
      %s158 = ssub.s32 256, 256
      %159 = vsyncadd [#allocation18], %s158
      %s160 = sshll.u32 [#allocation19], 4
      %s161 = int_to_ptr.vmem [resolvable:$true] %s160
      %166 = dma.hbm_to_vmem [thread:$0]  %s16, 256, %s161, [#allocation18], 128, 128, 8
    $region69: #{tpu_custom_call.1} parent=1 // pred_fallthru
      _
    // Predicated region
    $region70: #{tpu_custom_call.1} parent=1 // pred_check
      _
    $region71: #{tpu_custom_call.1} parent=1 // pred_check_branch
      %168 = sbr.rel (0) target = $region73
    $region72: #{tpu_custom_call.1} parent=1 // pred_region
      %169 = dma.done [#allocation3], 256
    $region73: #{tpu_custom_call.1} parent=1 // pred_fallthru
      _
    // Predicated region
    $region74: #{tpu_custom_call.1} parent=1 // pred_check
      _
    $region75: #{tpu_custom_call.1} parent=1 // pred_check_branch
      %171 = sbr.rel (0) target = $region77
    $region76: #{tpu_custom_call.1} parent=1 // pred_region
      %172 = dma.done [#allocation6], 256
    $region77: #{tpu_custom_call.1} parent=1 // pred_fallthru
      _
    // Predicated region
    $region78: #{tpu_custom_call.1} parent=1 // pred_check
      _
    $region79: #{tpu_custom_call.1} parent=1 // pred_check_branch
      %174 = sbr.rel (0) target = $region81
    $region80: #{tpu_custom_call.1} parent=1 // pred_region
      %175 = dma.done [#allocation6], 32
    $region81: #{tpu_custom_call.1} parent=1 // pred_fallthru
      _
    // Predicated region
    $region82: #{tpu_custom_call.1} parent=1 // pred_check
      _
    $region83: #{tpu_custom_call.1} parent=1 // pred_check_branch
      %177 = sbr.rel (0) target = $region85
    $region84: #{tpu_custom_call.1} parent=1 // pred_region
      %178 = dma.done [#allocation9], 16
    $region85: #{tpu_custom_call.1} parent=1 // pred_fallthru
      _
    // Predicated region
    $region86: #{tpu_custom_call.1} parent=1 // pred_check
      _
    $region87: #{tpu_custom_call.1} parent=1 // pred_check_branch
      %180 = sbr.rel (0) target = $region89
    $region88: #{tpu_custom_call.1} parent=1 // pred_region
      %181 = dma.done [#allocation9], 512
    $region89: #{tpu_custom_call.1} parent=1 // pred_fallthru
      _
    // Predicated region
    $region90: #{tpu_custom_call.1} parent=1 // pred_check
      _
    $region91: #{tpu_custom_call.1} parent=1 // pred_check_branch
      %183 = sbr.rel (0) target = $region93
    $region92: #{tpu_custom_call.1} parent=1 // pred_region
      %184 = dma.done [#allocation12], 16
    $region93: #{tpu_custom_call.1} parent=1 // pred_fallthru
      _
    // Predicated region
    $region94: #{tpu_custom_call.1} parent=1 // pred_check
      _
    $region95: #{tpu_custom_call.1} parent=1 // pred_check_branch
      %186 = sbr.rel (0) target = $region97
    $region96: #{tpu_custom_call.1} parent=1 // pred_region
      %187 = dma.done [#allocation12], 512
    $region97: #{tpu_custom_call.1} parent=1 // pred_fallthru
      _
    // Predicated region
    $region98: #{tpu_custom_call.1} parent=1 // pred_check
      _
    $region99: #{tpu_custom_call.1} parent=1 // pred_check_branch
      %189 = sbr.rel (0) target = $region101
    $region100: #{tpu_custom_call.1} parent=1 // pred_region
      %190 = dma.done [#allocation15], 256
    $region101: #{tpu_custom_call.1} parent=1 // pred_fallthru
      _
    // Predicated region
    $region102: #{tpu_custom_call.1} parent=1 // pred_check
      _
    $region103: #{tpu_custom_call.1} parent=1 // pred_check_branch
      %192 = sbr.rel (0) target = $region105
    $region104: #{tpu_custom_call.1} parent=1 // pred_region
      %193 = dma.done [#allocation15], 256
    $region105: #{tpu_custom_call.1} parent=1 // pred_fallthru
      _
    // Predicated region
    $region106: #{tpu_custom_call.1} parent=1 // pred_check
      _
    $region107: #{tpu_custom_call.1} parent=1 // pred_check_branch
      %195 = sbr.rel (0) target = $region109
    $region108: #{tpu_custom_call.1} parent=1 // pred_region
      %196 = dma.done [#allocation18], 256
    $region109: #{tpu_custom_call.1} parent=1 // pred_fallthru
      _
    // Predicated region
    $region110: #{tpu_custom_call.1} parent=1 // pred_check
      _
    $region111: #{tpu_custom_call.1} parent=1 // pred_check_branch
      %198 = sbr.rel (0) target = $region113
    $region112: #{tpu_custom_call.1} parent=1 // pred_region
      %199 = dma.done [#allocation18], 256
    $region113: #{tpu_custom_call.1} parent=1 // pred_fallthru
      _
    %v200 = vld [vmem:[#allocation2] sm:$0xff]
    %v201 = vld [vmem:[#allocation2 + $0x8] sm:$0xff]
    %v202 = vld [vmem:[#allocation5] sm:$0xff]
    %v203 = vld [vmem:[#allocation5 + $0x8] sm:$0xff]
    %v204 = vxor.u32 %v202, 2147483648
    %v205 = vxor.u32 %v203, 2147483648
    %v206 = vmul.f32 %v204, 1.442695
    %v207 = vpow.pop %v206
    %v208 = vmul.f32 %v205, 1.442695
    %v209 = vpow.pop %v208
    %v210 = vadd.f32 %v207, 1.0
    %v211 = vadd.f32 %v209, 1.0
    %v212 = vrcp.pop %v210
    %v213 = vmul.f32 1.0, %v212
    %v214 = vrcp.pop %v211
    %v215 = vmul.f32 1.0, %v214
    %v216 = vmul.f32 %v202, %v213
    %v217 = vmul.f32 %v203, %v215
    %v218 = vld [vmem:[%s2] sm:$0xff]
    %v219 = vld [vmem:[%s2 + $0x8] sm:$0xff]
    %v220 = vld [vmem:[%s2 + $0x10] sm:$0xff]
    %v221 = vld [vmem:[%s2 + $0x18] sm:$0xff]
    %v222 = vld [vmem:[%s3] sm:$0x1]
    %v224 = vlaneseq
    %v225 = vshrl.u32 %v224, 7
    %v226 = vsub.s32 0, %v225
    %v227 = vrot.slane %v222, %v226
    %vm229 = vcmask 261120
    %v231 = vsel %vm229, %v216, 0
    %v234 = vsel %vm229, %v217, 0
    %236 = vmatprep.subr.mxu0 0.0
    %237 = vmatpush1.msra.mxu0 %v218
    %238 = vmatprep.subr.mxu0 0.0
    %239 = vmatpush1.msra.mxu0 %v219
    %240 = vmatprep.subr.mxu0 0.0
    %241 = vmatpush1.msra.mxu0 %v220
    %242 = vmatprep.subr.mxu0 0.0
    %243 = vmatpush1.msra.mxu0 %v221
    %244 = vmatprep.subr.mxu0 0.0
    %245 = vmatpush1.msra.mxu0 0.0
    %246 = vmatprep.subr.mxu0 0.0
    %247 = vmatpush1.msra.mxu0 0.0
    %248 = vmatprep.subr.mxu0 0.0
    %249 = vmatpush1.msra.mxu0 0.0
    %250 = vmatprep.subr.mxu0 0.0
    %251 = vmatpush1.msra.mxu0 0.0
    %252 = vmatprep.subr.mxu0 0.0
    %253 = vmatpush1.msra.mxu0 0.0
    %254 = vmatprep.subr.mxu0 0.0
    %255 = vmatpush1.msra.mxu0 0.0
    %256 = vmatprep.subr.mxu0 0.0
    %257 = vmatpush1.msra.mxu0 0.0
    %258 = vmatprep.subr.mxu0 0.0
    %259 = vmatpush1.msra.mxu0 0.0
    %260 = vmatprep.subr.mxu0 0.0
    %261 = vmatpush1.msra.mxu0 0.0
    %262 = vmatprep.subr.mxu0 0.0
    %263 = vmatpush1.msra.mxu0 0.0
    %264 = vmatprep.subr.mxu0 0.0
    %265 = vmatpush1.msra.mxu0 0.0
    %266 = vmatprep.subr.mxu0 0.0
    %267 = vmatpush1.msra.mxu0 0.0
    %268 = vmatprep.subr.mxu0 0.0
    %269 = vmatpush1.msra.mxu0 0.0
    %270 = vmatprep.subr.mxu0 0.0
    %271 = vmatpush1.msra.mxu0 0.0
    %272 = vmatprep.subr.mxu0 0.0
    %273 = vmatpush1.msra.mxu0 0.0
    %274 = vmatprep.subr.mxu0 0.0
    %275 = vmatpush1.msra.mxu0 0.0
    %276 = vmatprep.subr.mxu0 0.0
    %277 = vmatpush1.msra.mxu0 0.0
    %278 = vmatprep.subr.mxu0 0.0
    %279 = vmatpush1.msra.mxu0 0.0
    %280 = vmatprep.subr.mxu0 0.0
    %281 = vmatpush1.msra.mxu0 0.0
    %282 = vmatprep.subr.mxu0 0.0
    %283 = vmatpush1.msra.mxu0 0.0
    %284 = vmatprep.subr.mxu0 0.0
    %285 = vmatpush1.msra.mxu0 0.0
    %286 = vmatprep.subr.mxu0 0.0
    %287 = vmatpush1.msra.mxu0 0.0
    %288 = vmatprep.subr.mxu0 0.0
    %289 = vmatpush1.msra.mxu0 0.0
    %290 = vmatprep.subr.mxu0 0.0
    %291 = vmatpush1.msra.mxu0 0.0
    %292 = vmatprep.subr.mxu0 0.0
    %293 = vmatpush1.msra.mxu0 0.0
    %294 = vmatprep.subr.mxu0 0.0
    %295 = vmatpush1.msra.mxu0 0.0
    %296 = vmatprep.subr.mxu0 0.0
    %297 = vmatpush1.msra.mxu0 0.0
    %298 = vmatprep.subr.mxu0 0.0
    %299 = vmatpush1.msra.mxu0 0.0
    %300 = vmatprep.mubr.f32.mxu0 0.0
    %301 = vmatmul.mubr.f32.gmra.mrb[0].mxu0 %v231
    %v302 = vpop.f32.mrb[0].mxu0
    %v303 = vadd.f32 %v227, %v302
    %v304 = vpop.f32.mrb[0].mxu0
    %305 = vmatprep.mubr.f32.mxu0 0.0
    %306 = vmatmul.mubr.f32.gmra.mrb[0].mxu0 %v234
    %v307 = vpop.f32.mrb[0].mxu0
    %v308 = vadd.f32 %v227, %v307
    %v309 = vpop.f32.mrb[0].mxu0
    %310 = vdwg.mxu0
    %v311 = vsel %vm229, %v200, 0.0
    %312 = vadd.xlane.f32.xlu0 %v311
    %v313 = vpop.xlane.xlu0 %312
    %v314 = vsel %vm229, %v201, 0.0
    %315 = vadd.xlane.f32.xlu0 %v314
    %v316 = vpop.xlane.xlu0 %315
    %v317 = vrcp.pop 32.0
    %v318 = vmul.f32 %v313, %v317
    %v319 = vmul.f32 %v316, %v317
    %v320 = vsub.f32 %v200, %v318
    %v321 = vsub.f32 %v201, %v319
    %v322 = vmul.f32 %v320, %v320
    %v323 = vmul.f32 %v321, %v321
    %v324 = vsel %vm229, %v322, 0.0
    %325 = vadd.xlane.f32.xlu0 %v324
    %v326 = vpop.xlane.xlu0 %325
    %v327 = vsel %vm229, %v323, 0.0
    %328 = vadd.xlane.f32.xlu0 %v327
    %v329 = vpop.xlane.xlu0 %328
    %v330 = vmul.f32 %v326, %v317
    %v331 = vmul.f32 %v329, %v317
    %v332 = vadd.f32 %v330, 1e-06
    %v333 = vadd.f32 %v331, 1e-06
    %v334 = vrsqrt.pop %v332
    %v335 = vrsqrt.pop %v333
    %v336 = vmul.f32 %v320, %v334
    %v337 = vmul.f32 %v321, %v335
    %v338 = vadd.f32 %v303, 1.0
    %v339 = vadd.f32 %v308, 1.0
    %342 = vrot.lane.b32.xlu0 %v336, 32
    %v343 = vpop.permute.xlu0 %342
    %344 = vrot.lane.b32.xlu0 %v337, 32
    %v345 = vpop.permute.xlu0 %344
    %v348 = vmul.f32 %v338, %v343
    %v349 = vmul.f32 %v339, %v345
    %352 = vrot.lane.b32.xlu0 %v303, 32
    %v353 = vpop.permute.xlu0 %352
    %354 = vrot.lane.b32.xlu0 %v308, 32
    %v355 = vpop.permute.xlu0 %354
    %v358 = vadd.f32 %v348, %v353
    %v359 = vadd.f32 %v349, %v355
    %v360 = vld [vmem:[%s4] sm:$0xff]
    %v361 = vld [vmem:[%s4 + $0x8] sm:$0xff]
    %v362 = vld [vmem:[%s4 + $0x10] sm:$0xff]
    %v363 = vld [vmem:[%s4 + $0x18] sm:$0xff]
    %v364 = vld [vmem:[%s4 + $0x20] sm:$0xff]
    %v365 = vld [vmem:[%s4 + $0x28] sm:$0xff]
    %v366 = vld [vmem:[%s4 + $0x30] sm:$0xff]
    %v367 = vld [vmem:[%s4 + $0x38] sm:$0xff]
    %v368 = vld [vmem:[#allocation7] sm:$0x3]
    %v370 = vlaneseq
    %v371 = vshrl.u32 %v370, 7
    %v372 = vsub.s32 0, %v371
    %v373 = vrot.slane %v368, %v372
    %v374 = vlaneseq
    %v375 = vshrl.u32 %v374, 7
    %v376 = vsub.s32 1, %v375
    %v377 = vrot.slane %v368, %v376
    %382 = vrot.lane.b32.xlu0 %v358, 96
    %v383 = vpop.permute.xlu0 %382
    %384 = vrot.lane.b32.xlu0 %v359, 96
    %v385 = vpop.permute.xlu0 %384
    %v386 = vsel %vm229, %v383, 0
    %v388 = vsel %vm229, %v385, 0
    %390 = vmatprep.subr.mxu0 %v361
    %391 = vmatpush1.msra.mxu0 %v360
    %392 = vmatprep.subr.mxu0 %v363
    %393 = vmatpush1.msra.mxu0 %v362
    %394 = vmatprep.subr.mxu0 %v365
    %395 = vmatpush1.msra.mxu0 %v364
    %396 = vmatprep.subr.mxu0 %v367
    %397 = vmatpush1.msra.mxu0 %v366
    %398 = vmatprep.subr.mxu0 0.0
    %399 = vmatpush1.msra.mxu0 0.0
    %400 = vmatprep.subr.mxu0 0.0
    %401 = vmatpush1.msra.mxu0 0.0
    %402 = vmatprep.subr.mxu0 0.0
    %403 = vmatpush1.msra.mxu0 0.0
    %404 = vmatprep.subr.mxu0 0.0
    %405 = vmatpush1.msra.mxu0 0.0
    %406 = vmatprep.subr.mxu0 0.0
    %407 = vmatpush1.msra.mxu0 0.0
    %408 = vmatprep.subr.mxu0 0.0
    %409 = vmatpush1.msra.mxu0 0.0
    %410 = vmatprep.subr.mxu0 0.0
    %411 = vmatpush1.msra.mxu0 0.0
    %412 = vmatprep.subr.mxu0 0.0
    %413 = vmatpush1.msra.mxu0 0.0
    %414 = vmatprep.subr.mxu0 0.0
    %415 = vmatpush1.msra.mxu0 0.0
    %416 = vmatprep.subr.mxu0 0.0
    %417 = vmatpush1.msra.mxu0 0.0
    %418 = vmatprep.subr.mxu0 0.0
    %419 = vmatpush1.msra.mxu0 0.0
    %420 = vmatprep.subr.mxu0 0.0
    %421 = vmatpush1.msra.mxu0 0.0
    %422 = vmatprep.subr.mxu0 0.0
    %423 = vmatpush1.msra.mxu0 0.0
    %424 = vmatprep.subr.mxu0 0.0
    %425 = vmatpush1.msra.mxu0 0.0
    %426 = vmatprep.subr.mxu0 0.0
    %427 = vmatpush1.msra.mxu0 0.0
    %428 = vmatprep.subr.mxu0 0.0
    %429 = vmatpush1.msra.mxu0 0.0
    %430 = vmatprep.subr.mxu0 0.0
    %431 = vmatpush1.msra.mxu0 0.0
    %432 = vmatprep.subr.mxu0 0.0
    %433 = vmatpush1.msra.mxu0 0.0
    %434 = vmatprep.subr.mxu0 0.0
    %435 = vmatpush1.msra.mxu0 0.0
    %436 = vmatprep.subr.mxu0 0.0
    %437 = vmatpush1.msra.mxu0 0.0
    %438 = vmatprep.subr.mxu0 0.0
    %439 = vmatpush1.msra.mxu0 0.0
    %440 = vmatprep.subr.mxu0 0.0
    %441 = vmatpush1.msra.mxu0 0.0
    %442 = vmatprep.subr.mxu0 0.0
    %443 = vmatpush1.msra.mxu0 0.0
    %444 = vmatprep.subr.mxu0 0.0
    %445 = vmatpush1.msra.mxu0 0.0
    %446 = vmatprep.subr.mxu0 0.0
    %447 = vmatpush1.msra.mxu0 0.0
    %448 = vmatprep.subr.mxu0 0.0
    %449 = vmatpush1.msra.mxu0 0.0
    %450 = vmatprep.subr.mxu0 0.0
    %451 = vmatpush1.msra.mxu0 0.0
    %452 = vmatprep.subr.mxu0 0.0
    %453 = vmatpush1.msra.mxu0 0.0
    %454 = vmatprep.mubr.f32.mxu0 0.0
    %455 = vmatmul.mubr.f32.gmra.mrb[0].mxu0 %v386
    %v456 = vpop.f32.mrb[0].mxu0
    %v457 = vadd.f32 %v373, %v456
    %v458 = vpop.f32.mrb[0].mxu0
    %v459 = vadd.f32 %v377, %v458
    %460 = vmatprep.mubr.f32.mxu0 0.0
    %461 = vmatmul.mubr.f32.gmra.mrb[0].mxu0 %v388
    %v462 = vpop.f32.mrb[0].mxu0
    %v463 = vadd.f32 %v373, %v462
    %v464 = vpop.f32.mrb[0].mxu0
    %v465 = vadd.f32 %v377, %v464
    %466 = vdwg.mxu0
    %v467 = vmul.f32 %v457, %v457
    %v468 = vmul.f32 %v463, %v463
    %v469 = vld [vmem:[#allocation13] sm:$0xff]
    %v470 = vld [vmem:[#allocation13 + $0x8] sm:$0xff]
    %v471 = vld [vmem:[#allocation13 + $0x10] sm:$0xff]
    %v472 = vld [vmem:[#allocation13 + $0x18] sm:$0xff]
    %v474 = vsel %vm229, %v467, 0
    %v477 = vsel %vm229, %v468, 0
    %479 = vmatprep.subr.mxu0 0.0
    %480 = vmatpush1.msra.mxu0 %v469
    %481 = vmatprep.subr.mxu0 0.0
    %482 = vmatpush1.msra.mxu0 %v470
    %483 = vmatprep.subr.mxu0 0.0
    %484 = vmatpush1.msra.mxu0 %v471
    %485 = vmatprep.subr.mxu0 0.0
    %486 = vmatpush1.msra.mxu0 %v472
    %487 = vmatprep.subr.mxu0 0.0
    %488 = vmatpush1.msra.mxu0 0.0
    %489 = vmatprep.subr.mxu0 0.0
    %490 = vmatpush1.msra.mxu0 0.0
    %491 = vmatprep.subr.mxu0 0.0
    %492 = vmatpush1.msra.mxu0 0.0
    %493 = vmatprep.subr.mxu0 0.0
    %494 = vmatpush1.msra.mxu0 0.0
    %495 = vmatprep.subr.mxu0 0.0
    %496 = vmatpush1.msra.mxu0 0.0
    %497 = vmatprep.subr.mxu0 0.0
    %498 = vmatpush1.msra.mxu0 0.0
    %499 = vmatprep.subr.mxu0 0.0
    %500 = vmatpush1.msra.mxu0 0.0
    %501 = vmatprep.subr.mxu0 0.0
    %502 = vmatpush1.msra.mxu0 0.0
    %503 = vmatprep.subr.mxu0 0.0
    %504 = vmatpush1.msra.mxu0 0.0
    %505 = vmatprep.subr.mxu0 0.0
    %506 = vmatpush1.msra.mxu0 0.0
    %507 = vmatprep.subr.mxu0 0.0
    %508 = vmatpush1.msra.mxu0 0.0
    %509 = vmatprep.subr.mxu0 0.0
    %510 = vmatpush1.msra.mxu0 0.0
    %511 = vmatprep.subr.mxu0 0.0
    %512 = vmatpush1.msra.mxu0 0.0
    %513 = vmatprep.subr.mxu0 0.0
    %514 = vmatpush1.msra.mxu0 0.0
    %515 = vmatprep.subr.mxu0 0.0
    %516 = vmatpush1.msra.mxu0 0.0
    %517 = vmatprep.subr.mxu0 0.0
    %518 = vmatpush1.msra.mxu0 0.0
    %519 = vmatprep.subr.mxu0 0.0
    %520 = vmatpush1.msra.mxu0 0.0
    %521 = vmatprep.subr.mxu0 0.0
    %522 = vmatpush1.msra.mxu0 0.0
    %523 = vmatprep.subr.mxu0 0.0
    %524 = vmatpush1.msra.mxu0 0.0
    %525 = vmatprep.subr.mxu0 0.0
    %526 = vmatpush1.msra.mxu0 0.0
    %527 = vmatprep.subr.mxu0 0.0
    %528 = vmatpush1.msra.mxu0 0.0
    %529 = vmatprep.subr.mxu0 0.0
    %530 = vmatpush1.msra.mxu0 0.0
    %531 = vmatprep.subr.mxu0 0.0
    %532 = vmatpush1.msra.mxu0 0.0
    %533 = vmatprep.subr.mxu0 0.0
    %534 = vmatpush1.msra.mxu0 0.0
    %535 = vmatprep.subr.mxu0 0.0
    %536 = vmatpush1.msra.mxu0 0.0
    %537 = vmatprep.subr.mxu0 0.0
    %538 = vmatpush1.msra.mxu0 0.0
    %539 = vmatprep.subr.mxu0 0.0
    %540 = vmatpush1.msra.mxu0 0.0
    %541 = vmatprep.subr.mxu0 0.0
    %542 = vmatpush1.msra.mxu0 0.0
    %543 = vmatprep.mubr.f32.mxu0 0.0
    %544 = vmatmul.mubr.f32.gmra.mrb[0].mxu0 %v474
    %v545 = vpop.f32.mrb[0].mxu0
    %v546 = vadd.f32 1.1920929e-07, %v545
    %v547 = vpop.f32.mrb[0].mxu0
    %548 = vmatprep.mubr.f32.mxu0 0.0
    %549 = vmatmul.mubr.f32.gmra.mrb[0].mxu0 %v477
    %v550 = vpop.f32.mrb[0].mxu0
    %v551 = vadd.f32 1.1920929e-07, %v550
    %v552 = vpop.f32.mrb[0].mxu0
    %553 = vdwg.mxu0
    %v554 = vrsqrt.pop %v546
    %v555 = vrsqrt.pop %v551
    %556 = vrot.lane.b32.xlu0 %v467, 96
    %v557 = vpop.permute.xlu0 %556
    %558 = vrot.lane.b32.xlu0 %v468, 96
    %v559 = vpop.permute.xlu0 %558
    %v560 = vsel %vm229, %v557, 0
    %v562 = vsel %vm229, %v559, 0
    %564 = vmatprep.subr.mxu0 0.0
    %565 = vmatpush1.msra.mxu0 %v469
    %566 = vmatprep.subr.mxu0 0.0
    %567 = vmatpush1.msra.mxu0 %v470
    %568 = vmatprep.subr.mxu0 0.0
    %569 = vmatpush1.msra.mxu0 %v471
    %570 = vmatprep.subr.mxu0 0.0
    %571 = vmatpush1.msra.mxu0 %v472
    %572 = vmatprep.subr.mxu0 0.0
    %573 = vmatpush1.msra.mxu0 0.0
    %574 = vmatprep.subr.mxu0 0.0
    %575 = vmatpush1.msra.mxu0 0.0
    %576 = vmatprep.subr.mxu0 0.0
    %577 = vmatpush1.msra.mxu0 0.0
    %578 = vmatprep.subr.mxu0 0.0
    %579 = vmatpush1.msra.mxu0 0.0
    %580 = vmatprep.subr.mxu0 0.0
    %581 = vmatpush1.msra.mxu0 0.0
    %582 = vmatprep.subr.mxu0 0.0
    %583 = vmatpush1.msra.mxu0 0.0
    %584 = vmatprep.subr.mxu0 0.0
    %585 = vmatpush1.msra.mxu0 0.0
    %586 = vmatprep.subr.mxu0 0.0
    %587 = vmatpush1.msra.mxu0 0.0
    %588 = vmatprep.subr.mxu0 0.0
    %589 = vmatpush1.msra.mxu0 0.0
    %590 = vmatprep.subr.mxu0 0.0
    %591 = vmatpush1.msra.mxu0 0.0
    %592 = vmatprep.subr.mxu0 0.0
    %593 = vmatpush1.msra.mxu0 0.0
    %594 = vmatprep.subr.mxu0 0.0
    %595 = vmatpush1.msra.mxu0 0.0
    %596 = vmatprep.subr.mxu0 0.0
    %597 = vmatpush1.msra.mxu0 0.0
    %598 = vmatprep.subr.mxu0 0.0
    %599 = vmatpush1.msra.mxu0 0.0
    %600 = vmatprep.subr.mxu0 0.0
    %601 = vmatpush1.msra.mxu0 0.0
    %602 = vmatprep.subr.mxu0 0.0
    %603 = vmatpush1.msra.mxu0 0.0
    %604 = vmatprep.subr.mxu0 0.0
    %605 = vmatpush1.msra.mxu0 0.0
    %606 = vmatprep.subr.mxu0 0.0
    %607 = vmatpush1.msra.mxu0 0.0
    %608 = vmatprep.subr.mxu0 0.0
    %609 = vmatpush1.msra.mxu0 0.0
    %610 = vmatprep.subr.mxu0 0.0
    %611 = vmatpush1.msra.mxu0 0.0
    %612 = vmatprep.subr.mxu0 0.0
    %613 = vmatpush1.msra.mxu0 0.0
    %614 = vmatprep.subr.mxu0 0.0
    %615 = vmatpush1.msra.mxu0 0.0
    %616 = vmatprep.subr.mxu0 0.0
    %617 = vmatpush1.msra.mxu0 0.0
    %618 = vmatprep.subr.mxu0 0.0
    %619 = vmatpush1.msra.mxu0 0.0
    %620 = vmatprep.subr.mxu0 0.0
    %621 = vmatpush1.msra.mxu0 0.0
    %622 = vmatprep.subr.mxu0 0.0
    %623 = vmatpush1.msra.mxu0 0.0
    %624 = vmatprep.subr.mxu0 0.0
    %625 = vmatpush1.msra.mxu0 0.0
    %626 = vmatprep.subr.mxu0 0.0
    %627 = vmatpush1.msra.mxu0 0.0
    %628 = vmatprep.mubr.f32.mxu0 0.0
    %629 = vmatmul.mubr.f32.gmra.mrb[0].mxu0 %v560
    %v630 = vpop.f32.mrb[0].mxu0
    %v631 = vadd.f32 1.1920929e-07, %v630
    %v632 = vpop.f32.mrb[0].mxu0
    %633 = vmatprep.mubr.f32.mxu0 0.0
    %634 = vmatmul.mubr.f32.gmra.mrb[0].mxu0 %v562
    %v635 = vpop.f32.mrb[0].mxu0
    %v636 = vadd.f32 1.1920929e-07, %v635
    %v637 = vpop.f32.mrb[0].mxu0
    %638 = vdwg.mxu0
    %v639 = vrsqrt.pop %v631
    %v640 = vrsqrt.pop %v636
    %v641 = vld [vmem:[#allocation14] sm:$0xff]
    %v642 = vld [vmem:[#allocation14 + $0x8] sm:$0xff]
    %v643 = vmul.f32 %v457, %v641
    %v644 = vmul.f32 %v463, %v642
    %v645 = vld [vmem:[%s13] sm:$0xff]
    %v646 = vld [vmem:[%s13 + $0x8] sm:$0xff]
    %649 = vrot.lane.b32.xlu0 %v645, 96
    %v650 = vpop.permute.xlu0 %649
    %651 = vrot.lane.b32.xlu0 %v646, 96
    %v652 = vpop.permute.xlu0 %651
    %v655 = vmul.f32 %v457, %v650
    %v656 = vmul.f32 %v463, %v652
    %659 = vrot.lane.b32.xlu0 %v655, 32
    %v660 = vpop.permute.xlu0 %659
    %661 = vrot.lane.b32.xlu0 %v656, 32
    %v662 = vpop.permute.xlu0 %661
    %v665 = vadd.f32 %v643, %v660
    %v666 = vadd.f32 %v644, %v662
    %v667 = vmul.f32 %v554, %v665
    %v668 = vmul.f32 %v555, %v666
    %v669 = vld [vmem:[#allocation16] sm:$0xff]
    %v670 = vld [vmem:[#allocation16 + $0x8] sm:$0xff]
    %673 = vrot.lane.b32.xlu0 %v669, 32
    %v674 = vpop.permute.xlu0 %673
    %675 = vrot.lane.b32.xlu0 %v670, 32
    %v676 = vpop.permute.xlu0 %675
    %v679 = vmul.f32 %v457, %v674
    %v680 = vmul.f32 %v463, %v676
    %v681 = vld [vmem:[#allocation17] sm:$0xff]
    %v682 = vld [vmem:[#allocation17 + $0x8] sm:$0xff]
    %v683 = vmul.f32 %v459, %v681
    %v684 = vmul.f32 %v465, %v682
    %687 = vrot.lane.b32.xlu0 %v683, 32
    %v688 = vpop.permute.xlu0 %687
    %689 = vrot.lane.b32.xlu0 %v684, 32
    %v690 = vpop.permute.xlu0 %689
    %v693 = vadd.f32 %v679, %v688
    %v694 = vadd.f32 %v680, %v690
    %697 = vrot.lane.b32.xlu0 %v693, 96
    %v698 = vpop.permute.xlu0 %697
    %699 = vrot.lane.b32.xlu0 %v694, 96
    %v700 = vpop.permute.xlu0 %699
    %v703 = vmul.f32 %v639, %v698
    %v704 = vmul.f32 %v640, %v700
    %v705 = vmul.f32 %v459, 0.5
    %v706 = vmul.f32 %v465, 0.5
    %v707 = vmul.f32 %v459, 0.044715
    %v708 = vmul.f32 %v465, 0.044715
    %v709 = vmul.f32 %v707, %v459
    %v710 = vmul.f32 %v708, %v465
    %v711 = vmul.f32 %v709, %v459
    %v712 = vmul.f32 %v710, %v465
    %v713 = vadd.f32 %v459, %v711
    %v714 = vadd.f32 %v465, %v712
    %v715 = vmul.f32 %v713, 0.7978846
    %v716 = vmul.f32 %v714, 0.7978846
    %v717 = vtanh.pop %v715
    %v718 = vtanh.pop %v716
    %v719 = vadd.f32 %v717, 1.0
    %v720 = vadd.f32 %v718, 1.0
    %v721 = vmul.f32 %v705, %v719
    %v722 = vmul.f32 %v706, %v720
    %v723 = vld [vmem:[%s6] sm:$0xff]
    %v724 = vld [vmem:[%s6 + $0x8] sm:$0xff]
    %v725 = vld [vmem:[%s6 + $0x10] sm:$0xff]
    %v726 = vld [vmem:[%s6 + $0x18] sm:$0xff]
    %v727 = vld [vmem:[%s6 + $0x20] sm:$0xff]
    %v728 = vld [vmem:[%s6 + $0x28] sm:$0xff]
    %v729 = vld [vmem:[%s6 + $0x30] sm:$0xff]
    %v730 = vld [vmem:[%s6 + $0x38] sm:$0xff]
    %v731 = vld [vmem:[#allocation8] sm:$0x1]
    %v733 = vlaneseq
    %v734 = vshrl.u32 %v733, 7
    %v735 = vsub.s32 0, %v734
    %v736 = vrot.slane %v731, %v735
    %740 = vrot.lane.b32.xlu0 %v721, 96
    %v741 = vpop.permute.xlu0 %740
    %742 = vrot.lane.b32.xlu0 %v722, 96
    %v743 = vpop.permute.xlu0 %742
    %vm744 = vcmask 523264
    %v745 = vsel %vm744, %v741, 0
    %v747 = vsel %vm744, %v743, 0
    %749 = vmatprep.subr.mxu0 0.0
    %750 = vmatpush1.msra.mxu0 %v723
    %751 = vmatprep.subr.mxu0 0.0
    %752 = vmatpush1.msra.mxu0 %v724
    %753 = vmatprep.subr.mxu0 0.0
    %754 = vmatpush1.msra.mxu0 %v725
    %755 = vmatprep.subr.mxu0 0.0
    %756 = vmatpush1.msra.mxu0 %v726
    %757 = vmatprep.subr.mxu0 0.0
    %758 = vmatpush1.msra.mxu0 %v727
    %759 = vmatprep.subr.mxu0 0.0
    %760 = vmatpush1.msra.mxu0 %v728
    %761 = vmatprep.subr.mxu0 0.0
    %762 = vmatpush1.msra.mxu0 %v729
    %763 = vmatprep.subr.mxu0 0.0
    %764 = vmatpush1.msra.mxu0 %v730
    %765 = vmatprep.subr.mxu0 0.0
    %766 = vmatpush1.msra.mxu0 0.0
    %767 = vmatprep.subr.mxu0 0.0
    %768 = vmatpush1.msra.mxu0 0.0
    %769 = vmatprep.subr.mxu0 0.0
    %770 = vmatpush1.msra.mxu0 0.0
    %771 = vmatprep.subr.mxu0 0.0
    %772 = vmatpush1.msra.mxu0 0.0
    %773 = vmatprep.subr.mxu0 0.0
    %774 = vmatpush1.msra.mxu0 0.0
    %775 = vmatprep.subr.mxu0 0.0
    %776 = vmatpush1.msra.mxu0 0.0
    %777 = vmatprep.subr.mxu0 0.0
    %778 = vmatpush1.msra.mxu0 0.0
    %779 = vmatprep.subr.mxu0 0.0
    %780 = vmatpush1.msra.mxu0 0.0
    %781 = vmatprep.subr.mxu0 0.0
    %782 = vmatpush1.msra.mxu0 0.0
    %783 = vmatprep.subr.mxu0 0.0
    %784 = vmatpush1.msra.mxu0 0.0
    %785 = vmatprep.subr.mxu0 0.0
    %786 = vmatpush1.msra.mxu0 0.0
    %787 = vmatprep.subr.mxu0 0.0
    %788 = vmatpush1.msra.mxu0 0.0
    %789 = vmatprep.subr.mxu0 0.0
    %790 = vmatpush1.msra.mxu0 0.0
    %791 = vmatprep.subr.mxu0 0.0
    %792 = vmatpush1.msra.mxu0 0.0
    %793 = vmatprep.subr.mxu0 0.0
    %794 = vmatpush1.msra.mxu0 0.0
    %795 = vmatprep.subr.mxu0 0.0
    %796 = vmatpush1.msra.mxu0 0.0
    %797 = vmatprep.subr.mxu0 0.0
    %798 = vmatpush1.msra.mxu0 0.0
    %799 = vmatprep.subr.mxu0 0.0
    %800 = vmatpush1.msra.mxu0 0.0
    %801 = vmatprep.subr.mxu0 0.0
    %802 = vmatpush1.msra.mxu0 0.0
    %803 = vmatprep.subr.mxu0 0.0
    %804 = vmatpush1.msra.mxu0 0.0
    %805 = vmatprep.subr.mxu0 0.0
    %806 = vmatpush1.msra.mxu0 0.0
    %807 = vmatprep.subr.mxu0 0.0
    %808 = vmatpush1.msra.mxu0 0.0
    %809 = vmatprep.subr.mxu0 0.0
    %810 = vmatpush1.msra.mxu0 0.0
    %811 = vmatprep.subr.mxu0 0.0
    %812 = vmatpush1.msra.mxu0 0.0
    %813 = vmatprep.mubr.f32.mxu0 0.0
    %814 = vmatmul.mubr.f32.gmra.mrb[0].mxu0 %v745
    %v815 = vpop.f32.mrb[0].mxu0
    %v816 = vadd.f32 %v736, %v815
    %v817 = vpop.f32.mrb[0].mxu0
    %818 = vmatprep.mubr.f32.mxu0 0.0
    %819 = vmatmul.mubr.f32.gmra.mrb[0].mxu0 %v747
    %v820 = vpop.f32.mrb[0].mxu0
    %v821 = vadd.f32 %v736, %v820
    %v822 = vpop.f32.mrb[0].mxu0
    %823 = vdwg.mxu0
    %v824 = vmul.f32 %v816, 0.5
    %v825 = vmul.f32 %v821, 0.5
    %v826 = vmul.f32 %v816, 0.044715
    %v827 = vmul.f32 %v821, 0.044715
    %v828 = vmul.f32 %v826, %v816
    %v829 = vmul.f32 %v827, %v821
    %v830 = vmul.f32 %v828, %v816
    %v831 = vmul.f32 %v829, %v821
    %v832 = vadd.f32 %v816, %v830
    %v833 = vadd.f32 %v821, %v831
    %v834 = vmul.f32 %v832, 0.7978846
    %v835 = vmul.f32 %v833, 0.7978846
    %v836 = vtanh.pop %v834
    %v837 = vtanh.pop %v835
    %v838 = vadd.f32 %v836, 1.0
    %v839 = vadd.f32 %v837, 1.0
    %v840 = vmul.f32 %v824, %v838
    %v841 = vmul.f32 %v825, %v839
    %v842 = vld [vmem:[%s9] sm:$0xff]
    %v843 = vld [vmem:[%s9 + $0x8] sm:$0xff]
    %v844 = vld [vmem:[%s9 + $0x10] sm:$0xff]
    %v845 = vld [vmem:[%s9 + $0x18] sm:$0xff]
    %v846 = vld [vmem:[#allocation11] sm:$0x1]
    %v848 = vlaneseq
    %v849 = vshrl.u32 %v848, 7
    %v850 = vsub.s32 0, %v849
    %v851 = vrot.slane %v846, %v850
    %v854 = vsel %vm229, %v840, 0
    %v857 = vsel %vm229, %v841, 0
    %859 = vmatprep.subr.mxu0 0.0
    %860 = vmatpush1.msra.mxu0 %v842
    %861 = vmatprep.subr.mxu0 0.0
    %862 = vmatpush1.msra.mxu0 %v843
    %863 = vmatprep.subr.mxu0 0.0
    %864 = vmatpush1.msra.mxu0 %v844
    %865 = vmatprep.subr.mxu0 0.0
    %866 = vmatpush1.msra.mxu0 %v845
    %867 = vmatprep.subr.mxu0 0.0
    %868 = vmatpush1.msra.mxu0 0.0
    %869 = vmatprep.subr.mxu0 0.0
    %870 = vmatpush1.msra.mxu0 0.0
    %871 = vmatprep.subr.mxu0 0.0
    %872 = vmatpush1.msra.mxu0 0.0
    %873 = vmatprep.subr.mxu0 0.0
    %874 = vmatpush1.msra.mxu0 0.0
    %875 = vmatprep.subr.mxu0 0.0
    %876 = vmatpush1.msra.mxu0 0.0
    %877 = vmatprep.subr.mxu0 0.0
    %878 = vmatpush1.msra.mxu0 0.0
    %879 = vmatprep.subr.mxu0 0.0
    %880 = vmatpush1.msra.mxu0 0.0
    %881 = vmatprep.subr.mxu0 0.0
    %882 = vmatpush1.msra.mxu0 0.0
    %883 = vmatprep.subr.mxu0 0.0
    %884 = vmatpush1.msra.mxu0 0.0
    %885 = vmatprep.subr.mxu0 0.0
    %886 = vmatpush1.msra.mxu0 0.0
    %887 = vmatprep.subr.mxu0 0.0
    %888 = vmatpush1.msra.mxu0 0.0
    %889 = vmatprep.subr.mxu0 0.0
    %890 = vmatpush1.msra.mxu0 0.0
    %891 = vmatprep.subr.mxu0 0.0
    %892 = vmatpush1.msra.mxu0 0.0
    %893 = vmatprep.subr.mxu0 0.0
    %894 = vmatpush1.msra.mxu0 0.0
    %895 = vmatprep.subr.mxu0 0.0
    %896 = vmatpush1.msra.mxu0 0.0
    %897 = vmatprep.subr.mxu0 0.0
    %898 = vmatpush1.msra.mxu0 0.0
    %899 = vmatprep.subr.mxu0 0.0
    %900 = vmatpush1.msra.mxu0 0.0
    %901 = vmatprep.subr.mxu0 0.0
    %902 = vmatpush1.msra.mxu0 0.0
    %903 = vmatprep.subr.mxu0 0.0
    %904 = vmatpush1.msra.mxu0 0.0
    %905 = vmatprep.subr.mxu0 0.0
    %906 = vmatpush1.msra.mxu0 0.0
    %907 = vmatprep.subr.mxu0 0.0
    %908 = vmatpush1.msra.mxu0 0.0
    %909 = vmatprep.subr.mxu0 0.0
    %910 = vmatpush1.msra.mxu0 0.0
    %911 = vmatprep.subr.mxu0 0.0
    %912 = vmatpush1.msra.mxu0 0.0
    %913 = vmatprep.subr.mxu0 0.0
    %914 = vmatpush1.msra.mxu0 0.0
    %915 = vmatprep.subr.mxu0 0.0
    %916 = vmatpush1.msra.mxu0 0.0
    %917 = vmatprep.subr.mxu0 0.0
    %918 = vmatpush1.msra.mxu0 0.0
    %919 = vmatprep.subr.mxu0 0.0
    %920 = vmatpush1.msra.mxu0 0.0
    %921 = vmatprep.subr.mxu0 0.0
    %922 = vmatpush1.msra.mxu0 0.0
    %923 = vmatprep.mubr.f32.mxu0 0.0
    %924 = vmatmul.mubr.f32.gmra.mrb[0].mxu0 %v854
    %v925 = vpop.f32.mrb[0].mxu0
    %v926 = vadd.f32 %v851, %v925
    %v927 = vpop.f32.mrb[0].mxu0
    %928 = vmatprep.mubr.f32.mxu0 0.0
    %929 = vmatmul.mubr.f32.gmra.mrb[0].mxu0 %v857
    %v930 = vpop.f32.mrb[0].mxu0
    %v931 = vadd.f32 %v851, %v930
    %v932 = vpop.f32.mrb[0].mxu0
    %933 = vdwg.mxu0
    %v934 = vld [vmem:[#allocation10] sm:$0xff]
    %v935 = vld [vmem:[#allocation10 + $0x8] sm:$0xff]
    %v936 = vld [vmem:[#allocation10 + $0x10] sm:$0xff]
    %v937 = vld [vmem:[#allocation10 + $0x18] sm:$0xff]
    %940 = vrot.lane.b32.xlu0 %v457, 64
    %v941 = vpop.permute.xlu0 %940
    %942 = vrot.lane.b32.xlu0 %v463, 64
    %v943 = vpop.permute.xlu0 %942
    %v944 = vsel %vm229, %v941, 0
    %v946 = vsel %vm229, %v943, 0
    %948 = vmatprep.subr.mxu0 0.0
    %949 = vmatpush1.msra.mxu0 %v934
    %950 = vmatprep.subr.mxu0 0.0
    %951 = vmatpush1.msra.mxu0 %v935
    %952 = vmatprep.subr.mxu0 0.0
    %953 = vmatpush1.msra.mxu0 %v936
    %954 = vmatprep.subr.mxu0 0.0
    %955 = vmatpush1.msra.mxu0 %v937
    %956 = vmatprep.subr.mxu0 0.0
    %957 = vmatpush1.msra.mxu0 0.0
    %958 = vmatprep.subr.mxu0 0.0
    %959 = vmatpush1.msra.mxu0 0.0
    %960 = vmatprep.subr.mxu0 0.0
    %961 = vmatpush1.msra.mxu0 0.0
    %962 = vmatprep.subr.mxu0 0.0
    %963 = vmatpush1.msra.mxu0 0.0
    %964 = vmatprep.subr.mxu0 0.0
    %965 = vmatpush1.msra.mxu0 0.0
    %966 = vmatprep.subr.mxu0 0.0
    %967 = vmatpush1.msra.mxu0 0.0
    %968 = vmatprep.subr.mxu0 0.0
    %969 = vmatpush1.msra.mxu0 0.0
    %970 = vmatprep.subr.mxu0 0.0
    %971 = vmatpush1.msra.mxu0 0.0
    %972 = vmatprep.subr.mxu0 0.0
    %973 = vmatpush1.msra.mxu0 0.0
    %974 = vmatprep.subr.mxu0 0.0
    %975 = vmatpush1.msra.mxu0 0.0
    %976 = vmatprep.subr.mxu0 0.0
    %977 = vmatpush1.msra.mxu0 0.0
    %978 = vmatprep.subr.mxu0 0.0
    %979 = vmatpush1.msra.mxu0 0.0
    %980 = vmatprep.subr.mxu0 0.0
    %981 = vmatpush1.msra.mxu0 0.0
    %982 = vmatprep.subr.mxu0 0.0
    %983 = vmatpush1.msra.mxu0 0.0
    %984 = vmatprep.subr.mxu0 0.0
    %985 = vmatpush1.msra.mxu0 0.0
    %986 = vmatprep.subr.mxu0 0.0
    %987 = vmatpush1.msra.mxu0 0.0
    %988 = vmatprep.subr.mxu0 0.0
    %989 = vmatpush1.msra.mxu0 0.0
    %990 = vmatprep.subr.mxu0 0.0
    %991 = vmatpush1.msra.mxu0 0.0
    %992 = vmatprep.subr.mxu0 0.0
    %993 = vmatpush1.msra.mxu0 0.0
    %994 = vmatprep.subr.mxu0 0.0
    %995 = vmatpush1.msra.mxu0 0.0
    %996 = vmatprep.subr.mxu0 0.0
    %997 = vmatpush1.msra.mxu0 0.0
    %998 = vmatprep.subr.mxu0 0.0
    %999 = vmatpush1.msra.mxu0 0.0
    %1000 = vmatprep.subr.mxu0 0.0
    %1001 = vmatpush1.msra.mxu0 0.0
    %1002 = vmatprep.subr.mxu0 0.0
    %1003 = vmatpush1.msra.mxu0 0.0
    %1004 = vmatprep.subr.mxu0 0.0
    %1005 = vmatpush1.msra.mxu0 0.0
    %1006 = vmatprep.subr.mxu0 0.0
    %1007 = vmatpush1.msra.mxu0 0.0
    %1008 = vmatprep.subr.mxu0 0.0
    %1009 = vmatpush1.msra.mxu0 0.0
    %1010 = vmatprep.subr.mxu0 0.0
    %1011 = vmatpush1.msra.mxu0 0.0
    %1012 = vmatprep.mubr.f32.mxu0 0.0
    %1013 = vmatmul.mubr.f32.gmra.mrb[0].mxu0 %v944
    %v1014 = vpop.f32.mrb[0].mxu0
    %v1015 = vadd.f32 0.0, %v1014
    %v1016 = vpop.f32.mrb[0].mxu0
    %1017 = vmatprep.mubr.f32.mxu0 0.0
    %1018 = vmatmul.mubr.f32.gmra.mrb[0].mxu0 %v946
    %v1019 = vpop.f32.mrb[0].mxu0
    %v1020 = vadd.f32 0.0, %v1019
    %v1021 = vpop.f32.mrb[0].mxu0
    %1022 = vdwg.mxu0
    %v1023 = vld [vmem:[#allocation19] sm:$0xff]
    %v1024 = vld [vmem:[#allocation19 + $0x8] sm:$0xff]
    %vm1025 = vcmask 64512
    %v1027 = vsel %vm1025, %v667, 0
    %v1030 = vsel %vm1025, %v668, 0
    %v1033 = vsel %vm1025, %v703, 0
    %v1036 = vsel %vm1025, %v704, 0
    %1038 = vmatprep.subr.mxu0 0.0
    %1039 = vmatpush1.xpose.msra.mxu0 %v1033
    %1040 = vmatprep.subr.mxu0 0.0
    %1041 = vmatpush1.xpose.msra.mxu0 %v1036
    %1042 = vmatprep.subr.mxu0 0.0
    %1043 = vmatpush1.xpose.msra.mxu0 0.0
    %1044 = vmatprep.subr.mxu0 0.0
    %1045 = vmatpush1.xpose.msra.mxu0 0.0
    %1046 = vmatprep.subr.mxu0 0.0
    %1047 = vmatpush1.xpose.msra.mxu0 0.0
    %1048 = vmatprep.subr.mxu0 0.0
    %1049 = vmatpush1.xpose.msra.mxu0 0.0
    %1050 = vmatprep.subr.mxu0 0.0
    %1051 = vmatpush1.xpose.msra.mxu0 0.0
    %1052 = vmatprep.subr.mxu0 0.0
    %1053 = vmatpush1.xpose.msra.mxu0 0.0
    %1054 = vmatprep.subr.mxu0 0.0
    %1055 = vmatpush1.xpose.msra.mxu0 0.0
    %1056 = vmatprep.subr.mxu0 0.0
    %1057 = vmatpush1.xpose.msra.mxu0 0.0
    %1058 = vmatprep.subr.mxu0 0.0
    %1059 = vmatpush1.xpose.msra.mxu0 0.0
    %1060 = vmatprep.subr.mxu0 0.0
    %1061 = vmatpush1.xpose.msra.mxu0 0.0
    %1062 = vmatprep.subr.mxu0 0.0
    %1063 = vmatpush1.xpose.msra.mxu0 0.0
    %1064 = vmatprep.subr.mxu0 0.0
    %1065 = vmatpush1.xpose.msra.mxu0 0.0
    %1066 = vmatprep.subr.mxu0 0.0
    %1067 = vmatpush1.xpose.msra.mxu0 0.0
    %1068 = vmatprep.subr.mxu0 0.0
    %1069 = vmatpush1.xpose.msra.mxu0 0.0
    %1070 = vmatprep.subr.mxu0 0.0
    %1071 = vmatpush1.xpose.msra.mxu0 0.0
    %1072 = vmatprep.subr.mxu0 0.0
    %1073 = vmatpush1.xpose.msra.mxu0 0.0
    %1074 = vmatprep.subr.mxu0 0.0
    %1075 = vmatpush1.xpose.msra.mxu0 0.0
    %1076 = vmatprep.subr.mxu0 0.0
    %1077 = vmatpush1.xpose.msra.mxu0 0.0
    %1078 = vmatprep.subr.mxu0 0.0
    %1079 = vmatpush1.xpose.msra.mxu0 0.0
    %1080 = vmatprep.subr.mxu0 0.0
    %1081 = vmatpush1.xpose.msra.mxu0 0.0
    %1082 = vmatprep.subr.mxu0 0.0
    %1083 = vmatpush1.xpose.msra.mxu0 0.0
    %1084 = vmatprep.subr.mxu0 0.0
    %1085 = vmatpush1.xpose.msra.mxu0 0.0
    %1086 = vmatprep.subr.mxu0 0.0
    %1087 = vmatpush1.xpose.msra.mxu0 0.0
    %1088 = vmatprep.subr.mxu0 0.0
    %1089 = vmatpush1.xpose.msra.mxu0 0.0
    %1090 = vmatprep.subr.mxu0 0.0
    %1091 = vmatpush1.xpose.msra.mxu0 0.0
    %1092 = vmatprep.subr.mxu0 0.0
    %1093 = vmatpush1.xpose.msra.mxu0 0.0
    %1094 = vmatprep.subr.mxu0 0.0
    %1095 = vmatpush1.xpose.msra.mxu0 0.0
    %1096 = vmatprep.subr.mxu0 0.0
    %1097 = vmatpush1.xpose.msra.mxu0 0.0
    %1098 = vmatprep.subr.mxu0 0.0
    %1099 = vmatpush1.xpose.msra.mxu0 0.0
    %1100 = vmatprep.subr.mxu0 0.0
    %1101 = vmatpush1.xpose.msra.mxu0 0.0
    %1102 = vmatprep.mubr.f32.mxu0 0.0
    %1103 = vmatmul.mubr.f32.gmra.mrb[0].mxu0 %v1027
    %v1104 = vpop.f32.mrb[0].mxu0
    %v1105 = vadd.f32 0.0, %v1104
    %v1106 = vpop.f32.mrb[0].mxu0
    %1107 = vmatprep.mubr.f32.mxu0 0.0
    %1108 = vmatmul.mubr.f32.gmra.mrb[0].mxu0 %v1030
    %v1109 = vpop.f32.mrb[0].mxu0
    %v1110 = vadd.f32 0.0, %v1109
    %v1111 = vpop.f32.mrb[0].mxu0
    %1112 = vdwg.mxu0
    %v1113 = vmul.f32 %v1105, 0.35355338
    %v1114 = vmul.f32 %v1110, 0.35355338
    %v1115 = vadd.f32 %v1113, %v1023
    %v1116 = vadd.f32 %v1114, %v1024
    %vm1117 = vcmask 130048
    %v1118 = vsel %vm1117, %v1115, -inf
    %1119 = vmax.xlane.f32.xlu0 %v1118
    %v1120 = vpop.xlane.xlu0 %1119
    %v1121 = vsel %vm1117, %v1116, -inf
    %1122 = vmax.xlane.f32.xlu0 %v1121
    %v1123 = vpop.xlane.xlu0 %1122
    %v1124 = vsub.f32 %v1115, %v1120
    %v1125 = vsub.f32 %v1116, %v1123
    %v1126 = vmul.f32 %v1124, 1.442695
    %v1127 = vpow.pop %v1126
    %v1128 = vmul.f32 %v1125, 1.442695
    %v1129 = vpow.pop %v1128
    %v1130 = vsel %vm1117, %v1127, 0.0
    %1131 = vadd.xlane.f32.xlu0 %v1130
    %v1132 = vpop.xlane.xlu0 %1131
    %v1133 = vsel %vm1117, %v1129, 0.0
    %1134 = vadd.xlane.f32.xlu0 %v1133
    %v1135 = vpop.xlane.xlu0 %1134
    %v1136 = vrcp.pop %v1132
    %v1137 = vrcp.pop %v1135
    %v1138 = vmul.f32 %v1127, %v1136
    %v1139 = vmul.f32 %v1129, %v1137
    %v1141 = vsel %vm1117, %v1138, 0
    %v1144 = vsel %vm1117, %v1139, 0
    %1146 = vmatprep.subr.mxu0 0.0
    %1147 = vmatpush1.msra.mxu0 %v1015
    %1148 = vmatprep.subr.mxu0 0.0
    %1149 = vmatpush1.msra.mxu0 %v1020
    %1150 = vmatprep.subr.mxu0 0.0
    %1151 = vmatpush1.msra.mxu0 0.0
    %1152 = vmatprep.subr.mxu0 0.0
    %1153 = vmatpush1.msra.mxu0 0.0
    %1154 = vmatprep.subr.mxu0 0.0
    %1155 = vmatpush1.msra.mxu0 0.0
    %1156 = vmatprep.subr.mxu0 0.0
    %1157 = vmatpush1.msra.mxu0 0.0
    %1158 = vmatprep.subr.mxu0 0.0
    %1159 = vmatpush1.msra.mxu0 0.0
    %1160 = vmatprep.subr.mxu0 0.0
    %1161 = vmatpush1.msra.mxu0 0.0
    %1162 = vmatprep.subr.mxu0 0.0
    %1163 = vmatpush1.msra.mxu0 0.0
    %1164 = vmatprep.subr.mxu0 0.0
    %1165 = vmatpush1.msra.mxu0 0.0
    %1166 = vmatprep.subr.mxu0 0.0
    %1167 = vmatpush1.msra.mxu0 0.0
    %1168 = vmatprep.subr.mxu0 0.0
    %1169 = vmatpush1.msra.mxu0 0.0
    %1170 = vmatprep.subr.mxu0 0.0
    %1171 = vmatpush1.msra.mxu0 0.0
    %1172 = vmatprep.subr.mxu0 0.0
    %1173 = vmatpush1.msra.mxu0 0.0
    %1174 = vmatprep.subr.mxu0 0.0
    %1175 = vmatpush1.msra.mxu0 0.0
    %1176 = vmatprep.subr.mxu0 0.0
    %1177 = vmatpush1.msra.mxu0 0.0
    %1178 = vmatprep.subr.mxu0 0.0
    %1179 = vmatpush1.msra.mxu0 0.0
    %1180 = vmatprep.subr.mxu0 0.0
    %1181 = vmatpush1.msra.mxu0 0.0
    %1182 = vmatprep.subr.mxu0 0.0
    %1183 = vmatpush1.msra.mxu0 0.0
    %1184 = vmatprep.subr.mxu0 0.0
    %1185 = vmatpush1.msra.mxu0 0.0
    %1186 = vmatprep.subr.mxu0 0.0
    %1187 = vmatpush1.msra.mxu0 0.0
    %1188 = vmatprep.subr.mxu0 0.0
    %1189 = vmatpush1.msra.mxu0 0.0
    %1190 = vmatprep.subr.mxu0 0.0
    %1191 = vmatpush1.msra.mxu0 0.0
    %1192 = vmatprep.subr.mxu0 0.0
    %1193 = vmatpush1.msra.mxu0 0.0
    %1194 = vmatprep.subr.mxu0 0.0
    %1195 = vmatpush1.msra.mxu0 0.0
    %1196 = vmatprep.subr.mxu0 0.0
    %1197 = vmatpush1.msra.mxu0 0.0
    %1198 = vmatprep.subr.mxu0 0.0
    %1199 = vmatpush1.msra.mxu0 0.0
    %1200 = vmatprep.subr.mxu0 0.0
    %1201 = vmatpush1.msra.mxu0 0.0
    %1202 = vmatprep.subr.mxu0 0.0
    %1203 = vmatpush1.msra.mxu0 0.0
    %1204 = vmatprep.subr.mxu0 0.0
    %1205 = vmatpush1.msra.mxu0 0.0
    %1206 = vmatprep.subr.mxu0 0.0
    %1207 = vmatpush1.msra.mxu0 0.0
    %1208 = vmatprep.subr.mxu0 0.0
    %1209 = vmatpush1.msra.mxu0 0.0
    %1210 = vmatprep.mubr.f32.mxu0 0.0
    %1211 = vmatmul.mubr.f32.gmra.mrb[0].mxu0 %v1141
    %v1212 = vpop.f32.mrb[0].mxu0
    %v1213 = vadd.f32 0.0, %v1212
    %v1214 = vpop.f32.mrb[0].mxu0
    %1215 = vmatprep.mubr.f32.mxu0 0.0
    %1216 = vmatmul.mubr.f32.gmra.mrb[0].mxu0 %v1144
    %v1217 = vpop.f32.mrb[0].mxu0
    %v1218 = vadd.f32 0.0, %v1217
    %v1219 = vpop.f32.mrb[0].mxu0
    %1220 = vdwg.mxu0
    %v1221 = vadd.f32 %v926, %v1213
    %v1222 = vadd.f32 %v931, %v1218
    %1223 = vrot.lane.b32.xlu0 %v667, 120
    %v1224 = vpop.permute.xlu0 %1223
    %1225 = vrot.lane.b32.xlu0 %v668, 120
    %v1226 = vpop.permute.xlu0 %1225
    %1227 = vrot.lane.b32.xlu0 %v703, 120
    %v1228 = vpop.permute.xlu0 %1227
    %1229 = vrot.lane.b32.xlu0 %v704, 120
    %v1230 = vpop.permute.xlu0 %1229
    %v1231 = vsel %vm1025, %v1224, 0
    %v1233 = vsel %vm1025, %v1226, 0
    %v1235 = vsel %vm1025, %v1228, 0
    %v1237 = vsel %vm1025, %v1230, 0
    %1239 = vmatprep.subr.mxu0 0.0
    %1240 = vmatpush1.xpose.msra.mxu0 %v1235
    %1241 = vmatprep.subr.mxu0 0.0
    %1242 = vmatpush1.xpose.msra.mxu0 %v1237
    %1243 = vmatprep.subr.mxu0 0.0
    %1244 = vmatpush1.xpose.msra.mxu0 0.0
    %1245 = vmatprep.subr.mxu0 0.0
    %1246 = vmatpush1.xpose.msra.mxu0 0.0
    %1247 = vmatprep.subr.mxu0 0.0
    %1248 = vmatpush1.xpose.msra.mxu0 0.0
    %1249 = vmatprep.subr.mxu0 0.0
    %1250 = vmatpush1.xpose.msra.mxu0 0.0
    %1251 = vmatprep.subr.mxu0 0.0
    %1252 = vmatpush1.xpose.msra.mxu0 0.0
    %1253 = vmatprep.subr.mxu0 0.0
    %1254 = vmatpush1.xpose.msra.mxu0 0.0
    %1255 = vmatprep.subr.mxu0 0.0
    %1256 = vmatpush1.xpose.msra.mxu0 0.0
    %1257 = vmatprep.subr.mxu0 0.0
    %1258 = vmatpush1.xpose.msra.mxu0 0.0
    %1259 = vmatprep.subr.mxu0 0.0
    %1260 = vmatpush1.xpose.msra.mxu0 0.0
    %1261 = vmatprep.subr.mxu0 0.0
    %1262 = vmatpush1.xpose.msra.mxu0 0.0
    %1263 = vmatprep.subr.mxu0 0.0
    %1264 = vmatpush1.xpose.msra.mxu0 0.0
    %1265 = vmatprep.subr.mxu0 0.0
    %1266 = vmatpush1.xpose.msra.mxu0 0.0
    %1267 = vmatprep.subr.mxu0 0.0
    %1268 = vmatpush1.xpose.msra.mxu0 0.0
    %1269 = vmatprep.subr.mxu0 0.0
    %1270 = vmatpush1.xpose.msra.mxu0 0.0
    %1271 = vmatprep.subr.mxu0 0.0
    %1272 = vmatpush1.xpose.msra.mxu0 0.0
    %1273 = vmatprep.subr.mxu0 0.0
    %1274 = vmatpush1.xpose.msra.mxu0 0.0
    %1275 = vmatprep.subr.mxu0 0.0
    %1276 = vmatpush1.xpose.msra.mxu0 0.0
    %1277 = vmatprep.subr.mxu0 0.0
    %1278 = vmatpush1.xpose.msra.mxu0 0.0
    %1279 = vmatprep.subr.mxu0 0.0
    %1280 = vmatpush1.xpose.msra.mxu0 0.0
    %1281 = vmatprep.subr.mxu0 0.0
    %1282 = vmatpush1.xpose.msra.mxu0 0.0
    %1283 = vmatprep.subr.mxu0 0.0
    %1284 = vmatpush1.xpose.msra.mxu0 0.0
    %1285 = vmatprep.subr.mxu0 0.0
    %1286 = vmatpush1.xpose.msra.mxu0 0.0
    %1287 = vmatprep.subr.mxu0 0.0
    %1288 = vmatpush1.xpose.msra.mxu0 0.0
    %1289 = vmatprep.subr.mxu0 0.0
    %1290 = vmatpush1.xpose.msra.mxu0 0.0
    %1291 = vmatprep.subr.mxu0 0.0
    %1292 = vmatpush1.xpose.msra.mxu0 0.0
    %1293 = vmatprep.subr.mxu0 0.0
    %1294 = vmatpush1.xpose.msra.mxu0 0.0
    %1295 = vmatprep.subr.mxu0 0.0
    %1296 = vmatpush1.xpose.msra.mxu0 0.0
    %1297 = vmatprep.subr.mxu0 0.0
    %1298 = vmatpush1.xpose.msra.mxu0 0.0
    %1299 = vmatprep.subr.mxu0 0.0
    %1300 = vmatpush1.xpose.msra.mxu0 0.0
    %1301 = vmatprep.subr.mxu0 0.0
    %1302 = vmatpush1.xpose.msra.mxu0 0.0
    %1303 = vmatprep.mubr.f32.mxu0 0.0
    %1304 = vmatmul.mubr.f32.gmra.mrb[0].mxu0 %v1231
    %v1305 = vpop.f32.mrb[0].mxu0
    %v1306 = vadd.f32 0.0, %v1305
    %v1307 = vpop.f32.mrb[0].mxu0
    %1308 = vmatprep.mubr.f32.mxu0 0.0
    %1309 = vmatmul.mubr.f32.gmra.mrb[0].mxu0 %v1233
    %v1310 = vpop.f32.mrb[0].mxu0
    %v1311 = vadd.f32 0.0, %v1310
    %v1312 = vpop.f32.mrb[0].mxu0
    %1313 = vdwg.mxu0
    %v1314 = vmul.f32 %v1306, 0.35355338
    %v1315 = vmul.f32 %v1311, 0.35355338
    %v1316 = vadd.f32 %v1314, %v1023
    %v1317 = vadd.f32 %v1315, %v1024
    %v1318 = vsel %vm1117, %v1316, -inf
    %1319 = vmax.xlane.f32.xlu0 %v1318
    %v1320 = vpop.xlane.xlu0 %1319
    %v1321 = vsel %vm1117, %v1317, -inf
    %1322 = vmax.xlane.f32.xlu0 %v1321
    %v1323 = vpop.xlane.xlu0 %1322
    %v1324 = vsub.f32 %v1316, %v1320
    %v1325 = vsub.f32 %v1317, %v1323
    %v1326 = vmul.f32 %v1324, 1.442695
    %v1327 = vpow.pop %v1326
    %v1328 = vmul.f32 %v1325, 1.442695
    %v1329 = vpow.pop %v1328
    %v1330 = vsel %vm1117, %v1327, 0.0
    %1331 = vadd.xlane.f32.xlu0 %v1330
    %v1332 = vpop.xlane.xlu0 %1331
    %v1333 = vsel %vm1117, %v1329, 0.0
    %1334 = vadd.xlane.f32.xlu0 %v1333
    %v1335 = vpop.xlane.xlu0 %1334
    %v1336 = vrcp.pop %v1332
    %v1337 = vrcp.pop %v1335
    %v1338 = vmul.f32 %v1327, %v1336
    %v1339 = vmul.f32 %v1329, %v1337
    %1342 = vrot.lane.b32.xlu0 %v1015, 96
    %v1343 = vpop.permute.xlu0 %1342
    %1344 = vrot.lane.b32.xlu0 %v1020, 96
    %v1345 = vpop.permute.xlu0 %1344
    %v1349 = vsel %vm1117, %v1338, 0
    %v1352 = vsel %vm1117, %v1339, 0
    %1354 = vmatprep.subr.mxu0 0.0
    %1355 = vmatpush1.msra.mxu0 %v1343
    %1356 = vmatprep.subr.mxu0 0.0
    %1357 = vmatpush1.msra.mxu0 %v1345
    %1358 = vmatprep.subr.mxu0 0.0
    %1359 = vmatpush1.msra.mxu0 0.0
    %1360 = vmatprep.subr.mxu0 0.0
    %1361 = vmatpush1.msra.mxu0 0.0
    %1362 = vmatprep.subr.mxu0 0.0
    %1363 = vmatpush1.msra.mxu0 0.0
    %1364 = vmatprep.subr.mxu0 0.0
    %1365 = vmatpush1.msra.mxu0 0.0
    %1366 = vmatprep.subr.mxu0 0.0
    %1367 = vmatpush1.msra.mxu0 0.0
    %1368 = vmatprep.subr.mxu0 0.0
    %1369 = vmatpush1.msra.mxu0 0.0
    %1370 = vmatprep.subr.mxu0 0.0
    %1371 = vmatpush1.msra.mxu0 0.0
    %1372 = vmatprep.subr.mxu0 0.0
    %1373 = vmatpush1.msra.mxu0 0.0
    %1374 = vmatprep.subr.mxu0 0.0
    %1375 = vmatpush1.msra.mxu0 0.0
    %1376 = vmatprep.subr.mxu0 0.0
    %1377 = vmatpush1.msra.mxu0 0.0
    %1378 = vmatprep.subr.mxu0 0.0
    %1379 = vmatpush1.msra.mxu0 0.0
    %1380 = vmatprep.subr.mxu0 0.0
    %1381 = vmatpush1.msra.mxu0 0.0
    %1382 = vmatprep.subr.mxu0 0.0
    %1383 = vmatpush1.msra.mxu0 0.0
    %1384 = vmatprep.subr.mxu0 0.0
    %1385 = vmatpush1.msra.mxu0 0.0
    %1386 = vmatprep.subr.mxu0 0.0
    %1387 = vmatpush1.msra.mxu0 0.0
    %1388 = vmatprep.subr.mxu0 0.0
    %1389 = vmatpush1.msra.mxu0 0.0
    %1390 = vmatprep.subr.mxu0 0.0
    %1391 = vmatpush1.msra.mxu0 0.0
    %1392 = vmatprep.subr.mxu0 0.0
    %1393 = vmatpush1.msra.mxu0 0.0
    %1394 = vmatprep.subr.mxu0 0.0
    %1395 = vmatpush1.msra.mxu0 0.0
    %1396 = vmatprep.subr.mxu0 0.0
    %1397 = vmatpush1.msra.mxu0 0.0
    %1398 = vmatprep.subr.mxu0 0.0
    %1399 = vmatpush1.msra.mxu0 0.0
    %1400 = vmatprep.subr.mxu0 0.0
    %1401 = vmatpush1.msra.mxu0 0.0
    %1402 = vmatprep.subr.mxu0 0.0
    %1403 = vmatpush1.msra.mxu0 0.0
    %1404 = vmatprep.subr.mxu0 0.0
    %1405 = vmatpush1.msra.mxu0 0.0
    %1406 = vmatprep.subr.mxu0 0.0
    %1407 = vmatpush1.msra.mxu0 0.0
    %1408 = vmatprep.subr.mxu0 0.0
    %1409 = vmatpush1.msra.mxu0 0.0
    %1410 = vmatprep.subr.mxu0 0.0
    %1411 = vmatpush1.msra.mxu0 0.0
    %1412 = vmatprep.subr.mxu0 0.0
    %1413 = vmatpush1.msra.mxu0 0.0
    %1414 = vmatprep.subr.mxu0 0.0
    %1415 = vmatpush1.msra.mxu0 0.0
    %1416 = vmatprep.subr.mxu0 0.0
    %1417 = vmatpush1.msra.mxu0 0.0
    %1418 = vmatprep.mubr.f32.mxu0 0.0
    %1419 = vmatmul.mubr.f32.gmra.mrb[0].mxu0 %v1349
    %v1420 = vpop.f32.mrb[0].mxu0
    %v1421 = vadd.f32 0.0, %v1420
    %v1422 = vpop.f32.mrb[0].mxu0
    %1423 = vmatprep.mubr.f32.mxu0 0.0
    %1424 = vmatmul.mubr.f32.gmra.mrb[0].mxu0 %v1352
    %v1425 = vpop.f32.mrb[0].mxu0
    %v1426 = vadd.f32 0.0, %v1425
    %v1427 = vpop.f32.mrb[0].mxu0
    %1428 = vdwg.mxu0
    %v1429 = vadd.f32 %v1221, %v1421
    %v1430 = vadd.f32 %v1222, %v1426
    %1431 = vrot.lane.b32.xlu0 %v667, 112
    %v1432 = vpop.permute.xlu0 %1431
    %1433 = vrot.lane.b32.xlu0 %v668, 112
    %v1434 = vpop.permute.xlu0 %1433
    %1435 = vrot.lane.b32.xlu0 %v703, 112
    %v1436 = vpop.permute.xlu0 %1435
    %1437 = vrot.lane.b32.xlu0 %v704, 112
    %v1438 = vpop.permute.xlu0 %1437
    %v1439 = vsel %vm1025, %v1432, 0
    %v1441 = vsel %vm1025, %v1434, 0
    %v1443 = vsel %vm1025, %v1436, 0
    %v1445 = vsel %vm1025, %v1438, 0
    %1447 = vmatprep.subr.mxu0 0.0
    %1448 = vmatpush1.xpose.msra.mxu0 %v1443
    %1449 = vmatprep.subr.mxu0 0.0
    %1450 = vmatpush1.xpose.msra.mxu0 %v1445
    %1451 = vmatprep.subr.mxu0 0.0
    %1452 = vmatpush1.xpose.msra.mxu0 0.0
    %1453 = vmatprep.subr.mxu0 0.0
    %1454 = vmatpush1.xpose.msra.mxu0 0.0
    %1455 = vmatprep.subr.mxu0 0.0
    %1456 = vmatpush1.xpose.msra.mxu0 0.0
    %1457 = vmatprep.subr.mxu0 0.0
    %1458 = vmatpush1.xpose.msra.mxu0 0.0
    %1459 = vmatprep.subr.mxu0 0.0
    %1460 = vmatpush1.xpose.msra.mxu0 0.0
    %1461 = vmatprep.subr.mxu0 0.0
    %1462 = vmatpush1.xpose.msra.mxu0 0.0
    %1463 = vmatprep.subr.mxu0 0.0
    %1464 = vmatpush1.xpose.msra.mxu0 0.0
    %1465 = vmatprep.subr.mxu0 0.0
    %1466 = vmatpush1.xpose.msra.mxu0 0.0
    %1467 = vmatprep.subr.mxu0 0.0
    %1468 = vmatpush1.xpose.msra.mxu0 0.0
    %1469 = vmatprep.subr.mxu0 0.0
    %1470 = vmatpush1.xpose.msra.mxu0 0.0
    %1471 = vmatprep.subr.mxu0 0.0
    %1472 = vmatpush1.xpose.msra.mxu0 0.0
    %1473 = vmatprep.subr.mxu0 0.0
    %1474 = vmatpush1.xpose.msra.mxu0 0.0
    %1475 = vmatprep.subr.mxu0 0.0
    %1476 = vmatpush1.xpose.msra.mxu0 0.0
    %1477 = vmatprep.subr.mxu0 0.0
    %1478 = vmatpush1.xpose.msra.mxu0 0.0
    %1479 = vmatprep.subr.mxu0 0.0
    %1480 = vmatpush1.xpose.msra.mxu0 0.0
    %1481 = vmatprep.subr.mxu0 0.0
    %1482 = vmatpush1.xpose.msra.mxu0 0.0
    %1483 = vmatprep.subr.mxu0 0.0
    %1484 = vmatpush1.xpose.msra.mxu0 0.0
    %1485 = vmatprep.subr.mxu0 0.0
    %1486 = vmatpush1.xpose.msra.mxu0 0.0
    %1487 = vmatprep.subr.mxu0 0.0
    %1488 = vmatpush1.xpose.msra.mxu0 0.0
    %1489 = vmatprep.subr.mxu0 0.0
    %1490 = vmatpush1.xpose.msra.mxu0 0.0
    %1491 = vmatprep.subr.mxu0 0.0
    %1492 = vmatpush1.xpose.msra.mxu0 0.0
    %1493 = vmatprep.subr.mxu0 0.0
    %1494 = vmatpush1.xpose.msra.mxu0 0.0
    %1495 = vmatprep.subr.mxu0 0.0
    %1496 = vmatpush1.xpose.msra.mxu0 0.0
    %1497 = vmatprep.subr.mxu0 0.0
    %1498 = vmatpush1.xpose.msra.mxu0 0.0
    %1499 = vmatprep.subr.mxu0 0.0
    %1500 = vmatpush1.xpose.msra.mxu0 0.0
    %1501 = vmatprep.subr.mxu0 0.0
    %1502 = vmatpush1.xpose.msra.mxu0 0.0
    %1503 = vmatprep.subr.mxu0 0.0
    %1504 = vmatpush1.xpose.msra.mxu0 0.0
    %1505 = vmatprep.subr.mxu0 0.0
    %1506 = vmatpush1.xpose.msra.mxu0 0.0
    %1507 = vmatprep.subr.mxu0 0.0
    %1508 = vmatpush1.xpose.msra.mxu0 0.0
    %1509 = vmatprep.subr.mxu0 0.0
    %1510 = vmatpush1.xpose.msra.mxu0 0.0
    %1511 = vmatprep.mubr.f32.mxu0 0.0
    %1512 = vmatmul.mubr.f32.gmra.mrb[0].mxu0 %v1439
    %v1513 = vpop.f32.mrb[0].mxu0
    %v1514 = vadd.f32 0.0, %v1513
    %v1515 = vpop.f32.mrb[0].mxu0
    %1516 = vmatprep.mubr.f32.mxu0 0.0
    %1517 = vmatmul.mubr.f32.gmra.mrb[0].mxu0 %v1441
    %v1518 = vpop.f32.mrb[0].mxu0
    %v1519 = vadd.f32 0.0, %v1518
    %v1520 = vpop.f32.mrb[0].mxu0
    %1521 = vdwg.mxu0
    %v1522 = vmul.f32 %v1514, 0.35355338
    %v1523 = vmul.f32 %v1519, 0.35355338
    %v1524 = vadd.f32 %v1522, %v1023
    %v1525 = vadd.f32 %v1523, %v1024
    %v1526 = vsel %vm1117, %v1524, -inf
    %1527 = vmax.xlane.f32.xlu0 %v1526
    %v1528 = vpop.xlane.xlu0 %1527
    %v1529 = vsel %vm1117, %v1525, -inf
    %1530 = vmax.xlane.f32.xlu0 %v1529
    %v1531 = vpop.xlane.xlu0 %1530
    %v1532 = vsub.f32 %v1524, %v1528
    %v1533 = vsub.f32 %v1525, %v1531
    %v1534 = vmul.f32 %v1532, 1.442695
    %v1535 = vpow.pop %v1534
    %v1536 = vmul.f32 %v1533, 1.442695
    %v1537 = vpow.pop %v1536
    %v1538 = vsel %vm1117, %v1535, 0.0
    %1539 = vadd.xlane.f32.xlu0 %v1538
    %v1540 = vpop.xlane.xlu0 %1539
    %v1541 = vsel %vm1117, %v1537, 0.0
    %1542 = vadd.xlane.f32.xlu0 %v1541
    %v1543 = vpop.xlane.xlu0 %1542
    %v1544 = vrcp.pop %v1540
    %v1545 = vrcp.pop %v1543
    %v1546 = vmul.f32 %v1535, %v1544
    %v1547 = vmul.f32 %v1537, %v1545
    %1548 = vrot.lane.b32.xlu0 %v1015, 64
    %v1549 = vpop.permute.xlu0 %1548
    %1550 = vrot.lane.b32.xlu0 %v1020, 64
    %v1551 = vpop.permute.xlu0 %1550
    %v1555 = vsel %vm1117, %v1546, 0
    %v1558 = vsel %vm1117, %v1547, 0
    %1560 = vmatprep.subr.mxu0 0.0
    %1561 = vmatpush1.msra.mxu0 %v1549
    %1562 = vmatprep.subr.mxu0 0.0
    %1563 = vmatpush1.msra.mxu0 %v1551
    %1564 = vmatprep.subr.mxu0 0.0
    %1565 = vmatpush1.msra.mxu0 0.0
    %1566 = vmatprep.subr.mxu0 0.0
    %1567 = vmatpush1.msra.mxu0 0.0
    %1568 = vmatprep.subr.mxu0 0.0
    %1569 = vmatpush1.msra.mxu0 0.0
    %1570 = vmatprep.subr.mxu0 0.0
    %1571 = vmatpush1.msra.mxu0 0.0
    %1572 = vmatprep.subr.mxu0 0.0
    %1573 = vmatpush1.msra.mxu0 0.0
    %1574 = vmatprep.subr.mxu0 0.0
    %1575 = vmatpush1.msra.mxu0 0.0
    %1576 = vmatprep.subr.mxu0 0.0
    %1577 = vmatpush1.msra.mxu0 0.0
    %1578 = vmatprep.subr.mxu0 0.0
    %1579 = vmatpush1.msra.mxu0 0.0
    %1580 = vmatprep.subr.mxu0 0.0
    %1581 = vmatpush1.msra.mxu0 0.0
    %1582 = vmatprep.subr.mxu0 0.0
    %1583 = vmatpush1.msra.mxu0 0.0
    %1584 = vmatprep.subr.mxu0 0.0
    %1585 = vmatpush1.msra.mxu0 0.0
    %1586 = vmatprep.subr.mxu0 0.0
    %1587 = vmatpush1.msra.mxu0 0.0
    %1588 = vmatprep.subr.mxu0 0.0
    %1589 = vmatpush1.msra.mxu0 0.0
    %1590 = vmatprep.subr.mxu0 0.0
    %1591 = vmatpush1.msra.mxu0 0.0
    %1592 = vmatprep.subr.mxu0 0.0
    %1593 = vmatpush1.msra.mxu0 0.0
    %1594 = vmatprep.subr.mxu0 0.0
    %1595 = vmatpush1.msra.mxu0 0.0
    %1596 = vmatprep.subr.mxu0 0.0
    %1597 = vmatpush1.msra.mxu0 0.0
    %1598 = vmatprep.subr.mxu0 0.0
    %1599 = vmatpush1.msra.mxu0 0.0
    %1600 = vmatprep.subr.mxu0 0.0
    %1601 = vmatpush1.msra.mxu0 0.0
    %1602 = vmatprep.subr.mxu0 0.0
    %1603 = vmatpush1.msra.mxu0 0.0
    %1604 = vmatprep.subr.mxu0 0.0
    %1605 = vmatpush1.msra.mxu0 0.0
    %1606 = vmatprep.subr.mxu0 0.0
    %1607 = vmatpush1.msra.mxu0 0.0
    %1608 = vmatprep.subr.mxu0 0.0
    %1609 = vmatpush1.msra.mxu0 0.0
    %1610 = vmatprep.subr.mxu0 0.0
    %1611 = vmatpush1.msra.mxu0 0.0
    %1612 = vmatprep.subr.mxu0 0.0
    %1613 = vmatpush1.msra.mxu0 0.0
    %1614 = vmatprep.subr.mxu0 0.0
    %1615 = vmatpush1.msra.mxu0 0.0
    %1616 = vmatprep.subr.mxu0 0.0
    %1617 = vmatpush1.msra.mxu0 0.0
    %1618 = vmatprep.subr.mxu0 0.0
    %1619 = vmatpush1.msra.mxu0 0.0
    %1620 = vmatprep.subr.mxu0 0.0
    %1621 = vmatpush1.msra.mxu0 0.0
    %1622 = vmatprep.subr.mxu0 0.0
    %1623 = vmatpush1.msra.mxu0 0.0
    %1624 = vmatprep.mubr.f32.mxu0 0.0
    %1625 = vmatmul.mubr.f32.gmra.mrb[0].mxu0 %v1555
    %v1626 = vpop.f32.mrb[0].mxu0
    %v1627 = vadd.f32 0.0, %v1626
    %v1628 = vpop.f32.mrb[0].mxu0
    %1629 = vmatprep.mubr.f32.mxu0 0.0
    %1630 = vmatmul.mubr.f32.gmra.mrb[0].mxu0 %v1558
    %v1631 = vpop.f32.mrb[0].mxu0
    %v1632 = vadd.f32 0.0, %v1631
    %v1633 = vpop.f32.mrb[0].mxu0
    %1634 = vdwg.mxu0
    %v1635 = vadd.f32 %v1429, %v1627
    %v1636 = vadd.f32 %v1430, %v1632
    %1637 = vrot.lane.b32.xlu0 %v667, 104
    %v1638 = vpop.permute.xlu0 %1637
    %1639 = vrot.lane.b32.xlu0 %v668, 104
    %v1640 = vpop.permute.xlu0 %1639
    %1641 = vrot.lane.b32.xlu0 %v703, 104
    %v1642 = vpop.permute.xlu0 %1641
    %1643 = vrot.lane.b32.xlu0 %v704, 104
    %v1644 = vpop.permute.xlu0 %1643
    %v1645 = vsel %vm1025, %v1638, 0
    %v1647 = vsel %vm1025, %v1640, 0
    %v1649 = vsel %vm1025, %v1642, 0
    %v1651 = vsel %vm1025, %v1644, 0
    %1653 = vmatprep.subr.mxu0 0.0
    %1654 = vmatpush1.xpose.msra.mxu0 %v1649
    %1655 = vmatprep.subr.mxu0 0.0
    %1656 = vmatpush1.xpose.msra.mxu0 %v1651
    %1657 = vmatprep.subr.mxu0 0.0
    %1658 = vmatpush1.xpose.msra.mxu0 0.0
    %1659 = vmatprep.subr.mxu0 0.0
    %1660 = vmatpush1.xpose.msra.mxu0 0.0
    %1661 = vmatprep.subr.mxu0 0.0
    %1662 = vmatpush1.xpose.msra.mxu0 0.0
    %1663 = vmatprep.subr.mxu0 0.0
    %1664 = vmatpush1.xpose.msra.mxu0 0.0
    %1665 = vmatprep.subr.mxu0 0.0
    %1666 = vmatpush1.xpose.msra.mxu0 0.0
    %1667 = vmatprep.subr.mxu0 0.0
    %1668 = vmatpush1.xpose.msra.mxu0 0.0
    %1669 = vmatprep.subr.mxu0 0.0
    %1670 = vmatpush1.xpose.msra.mxu0 0.0
    %1671 = vmatprep.subr.mxu0 0.0
    %1672 = vmatpush1.xpose.msra.mxu0 0.0
    %1673 = vmatprep.subr.mxu0 0.0
    %1674 = vmatpush1.xpose.msra.mxu0 0.0
    %1675 = vmatprep.subr.mxu0 0.0
    %1676 = vmatpush1.xpose.msra.mxu0 0.0
    %1677 = vmatprep.subr.mxu0 0.0
    %1678 = vmatpush1.xpose.msra.mxu0 0.0
    %1679 = vmatprep.subr.mxu0 0.0
    %1680 = vmatpush1.xpose.msra.mxu0 0.0
    %1681 = vmatprep.subr.mxu0 0.0
    %1682 = vmatpush1.xpose.msra.mxu0 0.0
    %1683 = vmatprep.subr.mxu0 0.0
    %1684 = vmatpush1.xpose.msra.mxu0 0.0
    %1685 = vmatprep.subr.mxu0 0.0
    %1686 = vmatpush1.xpose.msra.mxu0 0.0
    %1687 = vmatprep.subr.mxu0 0.0
    %1688 = vmatpush1.xpose.msra.mxu0 0.0
    %1689 = vmatprep.subr.mxu0 0.0
    %1690 = vmatpush1.xpose.msra.mxu0 0.0
    %1691 = vmatprep.subr.mxu0 0.0
    %1692 = vmatpush1.xpose.msra.mxu0 0.0
    %1693 = vmatprep.subr.mxu0 0.0
    %1694 = vmatpush1.xpose.msra.mxu0 0.0
    %1695 = vmatprep.subr.mxu0 0.0
    %1696 = vmatpush1.xpose.msra.mxu0 0.0
    %1697 = vmatprep.subr.mxu0 0.0
    %1698 = vmatpush1.xpose.msra.mxu0 0.0
    %1699 = vmatprep.subr.mxu0 0.0
    %1700 = vmatpush1.xpose.msra.mxu0 0.0
    %1701 = vmatprep.subr.mxu0 0.0
    %1702 = vmatpush1.xpose.msra.mxu0 0.0
    %1703 = vmatprep.subr.mxu0 0.0
    %1704 = vmatpush1.xpose.msra.mxu0 0.0
    %1705 = vmatprep.subr.mxu0 0.0
    %1706 = vmatpush1.xpose.msra.mxu0 0.0
    %1707 = vmatprep.subr.mxu0 0.0
    %1708 = vmatpush1.xpose.msra.mxu0 0.0
    %1709 = vmatprep.subr.mxu0 0.0
    %1710 = vmatpush1.xpose.msra.mxu0 0.0
    %1711 = vmatprep.subr.mxu0 0.0
    %1712 = vmatpush1.xpose.msra.mxu0 0.0
    %1713 = vmatprep.subr.mxu0 0.0
    %1714 = vmatpush1.xpose.msra.mxu0 0.0
    %1715 = vmatprep.subr.mxu0 0.0
    %1716 = vmatpush1.xpose.msra.mxu0 0.0
    %1717 = vmatprep.mubr.f32.mxu0 0.0
    %1718 = vmatmul.mubr.f32.gmra.mrb[0].mxu0 %v1645
    %v1719 = vpop.f32.mrb[0].mxu0
    %v1720 = vadd.f32 0.0, %v1719
    %v1721 = vpop.f32.mrb[0].mxu0
    %1722 = vmatprep.mubr.f32.mxu0 0.0
    %1723 = vmatmul.mubr.f32.gmra.mrb[0].mxu0 %v1647
    %v1724 = vpop.f32.mrb[0].mxu0
    %v1725 = vadd.f32 0.0, %v1724
    %v1726 = vpop.f32.mrb[0].mxu0
    %1727 = vdwg.mxu0
    %v1728 = vmul.f32 %v1720, 0.35355338
    %v1729 = vmul.f32 %v1725, 0.35355338
    %v1730 = vadd.f32 %v1728, %v1023
    %v1731 = vadd.f32 %v1729, %v1024
    %v1732 = vsel %vm1117, %v1730, -inf
    %1733 = vmax.xlane.f32.xlu0 %v1732
    %v1734 = vpop.xlane.xlu0 %1733
    %v1735 = vsel %vm1117, %v1731, -inf
    %1736 = vmax.xlane.f32.xlu0 %v1735
    %v1737 = vpop.xlane.xlu0 %1736
    %v1738 = vsub.f32 %v1730, %v1734
    %v1739 = vsub.f32 %v1731, %v1737
    %v1740 = vmul.f32 %v1738, 1.442695
    %v1741 = vpow.pop %v1740
    %v1742 = vmul.f32 %v1739, 1.442695
    %v1743 = vpow.pop %v1742
    %v1744 = vsel %vm1117, %v1741, 0.0
    %1745 = vadd.xlane.f32.xlu0 %v1744
    %v1746 = vpop.xlane.xlu0 %1745
    %v1747 = vsel %vm1117, %v1743, 0.0
    %1748 = vadd.xlane.f32.xlu0 %v1747
    %v1749 = vpop.xlane.xlu0 %1748
    %v1750 = vrcp.pop %v1746
    %v1751 = vrcp.pop %v1749
    %v1752 = vmul.f32 %v1741, %v1750
    %v1753 = vmul.f32 %v1743, %v1751
    %1754 = vrot.lane.b32.xlu0 %v1015, 32
    %v1755 = vpop.permute.xlu0 %1754
    %1756 = vrot.lane.b32.xlu0 %v1020, 32
    %v1757 = vpop.permute.xlu0 %1756
    %v1761 = vsel %vm1117, %v1752, 0
    %v1764 = vsel %vm1117, %v1753, 0
    %1766 = vmatprep.subr.mxu0 0.0
    %1767 = vmatpush1.msra.mxu0 %v1755
    %1768 = vmatprep.subr.mxu0 0.0
    %1769 = vmatpush1.msra.mxu0 %v1757
    %1770 = vmatprep.subr.mxu0 0.0
    %1771 = vmatpush1.msra.mxu0 0.0
    %1772 = vmatprep.subr.mxu0 0.0
    %1773 = vmatpush1.msra.mxu0 0.0
    %1774 = vmatprep.subr.mxu0 0.0
    %1775 = vmatpush1.msra.mxu0 0.0
    %1776 = vmatprep.subr.mxu0 0.0
    %1777 = vmatpush1.msra.mxu0 0.0
    %1778 = vmatprep.subr.mxu0 0.0
    %1779 = vmatpush1.msra.mxu0 0.0
    %1780 = vmatprep.subr.mxu0 0.0
    %1781 = vmatpush1.msra.mxu0 0.0
    %1782 = vmatprep.subr.mxu0 0.0
    %1783 = vmatpush1.msra.mxu0 0.0
    %1784 = vmatprep.subr.mxu0 0.0
    %1785 = vmatpush1.msra.mxu0 0.0
    %1786 = vmatprep.subr.mxu0 0.0
    %1787 = vmatpush1.msra.mxu0 0.0
    %1788 = vmatprep.subr.mxu0 0.0
    %1789 = vmatpush1.msra.mxu0 0.0
    %1790 = vmatprep.subr.mxu0 0.0
    %1791 = vmatpush1.msra.mxu0 0.0
    %1792 = vmatprep.subr.mxu0 0.0
    %1793 = vmatpush1.msra.mxu0 0.0
    %1794 = vmatprep.subr.mxu0 0.0
    %1795 = vmatpush1.msra.mxu0 0.0
    %1796 = vmatprep.subr.mxu0 0.0
    %1797 = vmatpush1.msra.mxu0 0.0
    %1798 = vmatprep.subr.mxu0 0.0
    %1799 = vmatpush1.msra.mxu0 0.0
    %1800 = vmatprep.subr.mxu0 0.0
    %1801 = vmatpush1.msra.mxu0 0.0
    %1802 = vmatprep.subr.mxu0 0.0
    %1803 = vmatpush1.msra.mxu0 0.0
    %1804 = vmatprep.subr.mxu0 0.0
    %1805 = vmatpush1.msra.mxu0 0.0
    %1806 = vmatprep.subr.mxu0 0.0
    %1807 = vmatpush1.msra.mxu0 0.0
    %1808 = vmatprep.subr.mxu0 0.0
    %1809 = vmatpush1.msra.mxu0 0.0
    %1810 = vmatprep.subr.mxu0 0.0
    %1811 = vmatpush1.msra.mxu0 0.0
    %1812 = vmatprep.subr.mxu0 0.0
    %1813 = vmatpush1.msra.mxu0 0.0
    %1814 = vmatprep.subr.mxu0 0.0
    %1815 = vmatpush1.msra.mxu0 0.0
    %1816 = vmatprep.subr.mxu0 0.0
    %1817 = vmatpush1.msra.mxu0 0.0
    %1818 = vmatprep.subr.mxu0 0.0
    %1819 = vmatpush1.msra.mxu0 0.0
    %1820 = vmatprep.subr.mxu0 0.0
    %1821 = vmatpush1.msra.mxu0 0.0
    %1822 = vmatprep.subr.mxu0 0.0
    %1823 = vmatpush1.msra.mxu0 0.0
    %1824 = vmatprep.subr.mxu0 0.0
    %1825 = vmatpush1.msra.mxu0 0.0
    %1826 = vmatprep.subr.mxu0 0.0
    %1827 = vmatpush1.msra.mxu0 0.0
    %1828 = vmatprep.subr.mxu0 0.0
    %1829 = vmatpush1.msra.mxu0 0.0
    %1830 = vmatprep.mubr.f32.mxu0 0.0
    %1831 = vmatmul.mubr.f32.gmra.mrb[0].mxu0 %v1761
    %v1832 = vpop.f32.mrb[0].mxu0
    %v1833 = vadd.f32 0.0, %v1832
    %v1834 = vpop.f32.mrb[0].mxu0
    %1835 = vmatprep.mubr.f32.mxu0 0.0
    %1836 = vmatmul.mubr.f32.gmra.mrb[0].mxu0 %v1764
    %v1837 = vpop.f32.mrb[0].mxu0
    %v1838 = vadd.f32 0.0, %v1837
    %v1839 = vpop.f32.mrb[0].mxu0
    %1840 = vdwg.mxu0
    %v1841 = vadd.f32 %v1635, %v1833
    %v1842 = vadd.f32 %v1636, %v1838
    %1845 = vrot.lane.b32.xlu0 %v1841, 64
    %v1846 = vpop.permute.xlu0 %1845
    %1847 = vrot.lane.b32.xlu0 %v1842, 64
    %v1848 = vpop.permute.xlu0 %1847
    %v1851 = vmul.f32 %v303, %v1846
    %v1852 = vmul.f32 %v308, %v1848
    %1855 = vrot.lane.b32.xlu0 %v1851, 64
    %v1856 = vpop.permute.xlu0 %1855
    %1857 = vrot.lane.b32.xlu0 %v1852, 64
    %v1858 = vpop.permute.xlu0 %1857
    %v1861 = vadd.f32 %v200, %v1856
    %v1862 = vadd.f32 %v201, %v1858
    %1863 = vst.msk [vmem:[#allocation20] sm:$0xff] %vm229, %v1861
    %1864 = vst.msk [vmem:[#allocation20 + $0x8] sm:$0xff] %vm229, %v1862
    // Predicated region
    $region114: #{tpu_custom_call.1} parent=1 // pred_check
      _
    $region115: #{tpu_custom_call.1} parent=1 // pred_check_branch
      %1866 = sbr.rel (0) target = $region117
    $region116: #{tpu_custom_call.1} parent=1 // pred_region
      %s1868 = ssub.s32 256, 256
      %1869 = vsyncadd [#allocation4], %s1868
      %s1870 = sshll.u32 [#allocation20], 4
      %s1871 = int_to_ptr.vmem [resolvable:$true] %s1870
      %1876 = dma.vmem_to_hbm [thread:$0]  %s1871, 256, %s17, [#allocation4], 128, 128, 8
    $region117: #{tpu_custom_call.1} parent=1 // pred_fallthru
      _
    // Predicated region
    $region118: #{tpu_custom_call.1} parent=1 // pred_check
      _
    $region119: #{tpu_custom_call.1} parent=1 // pred_check_branch
      %1878 = sbr.rel (0) target = $region121
    $region120: #{tpu_custom_call.1} parent=1 // pred_region
      %1879 = dma.done [#allocation4], 256
    $region121: #{tpu_custom_call.1} parent=1 // pred_fallthru
      _
    %1880 = vsyncpa [#allocation3], 1
    %1881 = vsyncpa [#allocation6], 1
    %1882 = vsyncpa [#allocation9], 1
    %1883 = vsyncpa [#allocation12], 1
    %1884 = vsyncpa [#allocation15], 1
    %1885 = vsyncpa [#allocation18], 1
    %1886 = vsyncpa [#allocation4], 1

</llo_original>
